<compile_context>
chip_gen: v7x
topology: tpu7x:2x2x1
jax: 0.10.0
libtpu: 0.0.40
codegen_flags: <defaults>
</compile_context>

<pallas_src>
import math
import functools

import numpy as np
import jax
import jax.numpy as jnp
from jax.experimental import pallas as pl
from jax.experimental.pallas import tpu as pltpu


def _cross_attn_kernel(src_ref, gf_ref,
                       wq_ref, bq_ref, wkv_ref, bkv_ref,
                       wo_ref, bo_ref, gamma_ref, beta_ref,
                       hmask_ref, ones_ref, bias_ref,
                       out_ref,
                       *, num_heads: int, embed_dim: int, scale: float, eps: float):
    E = embed_dim
    H = num_heads

    # ---- input projections (weights pre-transposed; K & V fused into one matmul) ----------
    # src_ref: (Rq, E) = bt*Lq batch-major query rows; gf_ref: (Rk, E) = bt*Lk key/value rows.
    q = jnp.dot(src_ref[...], wq_ref[...], preferred_element_type=jnp.float32) + bq_ref[...]
    kv = jnp.dot(gf_ref[...], wkv_ref[...], preferred_element_type=jnp.float32) + bkv_ref[...]

    # ---- head-blocked K/V -----------------------------------------------------------------
    # Replicate the (Rk, 2E) K/V rows H times along sublanes (head-major) and zero out every
    # feature column not owned by that copy's head.  Blocked row c <-> (head h = c // Rk,
    # key row r = c % Rk).  This turns per-head attention into dense full-width matmuls.
    kv_blk = jnp.concatenate([kv] * H, axis=0) * hmask_ref[...]        # (C, 2E)
    k_blk = kv_blk[:, :E]                                              # (C, E)
    v_blk = kv_blk[:, E:]                                              # (C, E)

    # ---- all heads' scores in a single MXU matmul ------------------------------------------
    # s[i, c] = <q_i, k_blk_c> = score of query row i vs (head, key) c; bias_ref adds -1e30 at
    # cross-batch (query-row batch != key-row batch) entries so they vanish under exp().
    s = jnp.einsum("qe,ce->qc", q, k_blk,
                   preferred_element_type=jnp.float32) * scale + bias_ref[...]   # (Rq, C)

    # ---- per-(row, head) softmax ------------------------------------------------------------
    m = jnp.max(s, axis=-1, keepdims=True)      # per-row constant shift; cancels per head group
    p = jnp.exp(s - m)                          # masked entries underflow to exactly 0
    denom = jnp.dot(p, ones_ref[...], preferred_element_type=jnp.float32)  # per-head sums, broadcast
    denom = jnp.maximum(denom, 1e-30)
    inv = pl.reciprocal(denom, approx=True)     # EUP slot instead of VALU divide
    inv = inv * (2.0 - denom * inv)             # one Newton step -> ~f32-exact reciprocal
    p = p * inv

    # ---- context (all heads, already in concatenated layout) + output projection -----------
    ctx = jnp.dot(p, v_blk, preferred_element_type=jnp.float32)                  # (Rq, E)
    attn = jnp.dot(ctx, wo_ref[...], preferred_element_type=jnp.float32) + bo_ref[...]

    # ---- dropout (eval => identity) + residual + LayerNorm ----------------------------------
    resid = src_ref[...].astype(jnp.float32) + attn
    mean = jnp.mean(resid, axis=-1, keepdims=True)
    var = jnp.mean((resid - mean) ** 2, axis=-1, keepdims=True)
    out = (resid - mean) * jax.lax.rsqrt(var + eps) * gamma_ref[...] + beta_ref[...]
    out_ref[...] = out.astype(out_ref.dtype)


def _pick_block_batch(B, Lq, Lk):
    """Batch elements per grid step: amortize the ~0.35us/step overhead and raise matmul M,
    keep >= 2 grid steps when possible (v7x has 2 TensorCores sharded over the parallel axis),
    and keep the flattened block row counts sublane-aligned (multiple of 8)."""
    for cand in (8, 4, 2):
        if B % cand == 0 and B // cand >= 2 and (cand * Lq) % 8 == 0 and (cand * Lk) % 8 == 0:
            return cand
    if Lq % 8 == 0 and Lk % 8 == 0:
        return 1
    return B  # single full-extent block (always layout-legal)


def cross_attention_layer(src, graph_feat, params, *, num_heads: int, block_batch=None):
    """src: (B, Lq, E), graph_feat: (B, Lk, E). Returns (B, Lq, E)."""
    B, Lq, E = src.shape
    Bk, Lk, Ek = graph_feat.shape
    assert B == Bk and E == Ek
    assert E % num_heads == 0
    dh = E // num_heads

    bt = _pick_block_batch(B, Lq, Lk) if block_batch is None else block_batch
    assert B % bt == 0
    steps = B // bt
    Rq, Rk = bt * Lq, bt * Lk
    C = num_heads * Rk                       # head-major blocked K/V rows

    # ---- host-side weight plumbing: transpose once, fuse K/V --------------------------------
    wq_t = params["wq"].T                                                   # (E, E)
    wkv_t = jnp.concatenate([params["wk"].T, params["wv"].T], axis=1)       # (E, 2E)
    bq = params["bq"].reshape(1, E)
    bkv = jnp.concatenate([params["bk"].reshape(1, E), params["bv"].reshape(1, E)], axis=1)
    wo_t = params["wo"].T
    bo = params["bo"].reshape(1, E)
    gamma = params["gamma"].reshape(1, E)
    beta = params["beta"].reshape(1, E)

    # ---- host-side constant masks for the head-blocked attention ----------------------------
    col_head = np.arange(C) // Rk                        # head owning blocked row c
    feat_head = (np.arange(2 * E) % E) // dh             # head owning each K/V feature column
    hmask = jnp.asarray((col_head[:, None] == feat_head[None, :]).astype(np.float32))   # (C, 2E)
    ones_blk = jnp.asarray((col_head[:, None] == col_head[None, :]).astype(np.float32)) # (C, C)
    row_b = np.arange(Rq) // Lq                          # local batch of each query row
    col_b = (np.arange(C) % Rk) // Lk                    # local batch of each blocked row
    bias = jnp.asarray(
        np.where(row_b[:, None] == col_b[None, :], 0.0, -1e30).astype(np.float32))      # (Rq, C)

    # ---- flatten to (rows, E) so projections see M = bt*L rows ------------------------------
    src2 = src.reshape(B * Lq, E)
    gf2 = graph_feat.reshape(B * Lk, E)

    kernel = functools.partial(_cross_attn_kernel, num_heads=num_heads, embed_dim=E,
                               scale=1.0 / math.sqrt(dh), eps=1e-5)

    const = lambda shape: pl.BlockSpec(shape, lambda b: (0, 0))

    grid_spec = pltpu.PrefetchScalarGridSpec(
        num_scalar_prefetch=0,
        grid=(steps,),
        in_specs=[
            pl.BlockSpec((Rq, E), lambda b: (b, 0)),     # src rows
            pl.BlockSpec((Rk, E), lambda b: (b, 0)),     # graph_feat rows
            const((E, E)), const((1, E)),                # wq_t, bq
            const((E, 2 * E)), const((1, 2 * E)),        # wkv_t, bkv
            const((E, E)), const((1, E)),                # wo_t, bo
            const((1, E)), const((1, E)),                # gamma, beta
            const((C, 2 * E)), const((C, C)), const((Rq, C)),   # hmask, ones_blk, bias
        ],
        out_specs=pl.BlockSpec((Rq, E), lambda b: (b, 0)),
    )

    # Advisory cost estimate so XLA schedules surrounding ops sensibly.
    flops = int(2 * B * Lq * E * E               # Q projection
                + 2 * B * Lk * E * (2 * E)       # fused K/V projection
                + 2 * steps * Rq * C * E         # scores
                + 2 * steps * Rq * C * C         # per-head softmax denominators
                + 2 * steps * Rq * C * E         # context
                + 2 * B * Lq * E * E)            # output projection
    bytes_accessed = int(4 * (src2.size + gf2.size + B * Lq * E
                              + wq_t.size + wkv_t.size + wo_t.size
                              + hmask.size + ones_blk.size + bias.size + 6 * E))
    cost = pl.CostEstimate(flops=flops,
                           transcendentals=int(steps * Rq * C),
                           bytes_accessed=bytes_accessed)

    out2 = pl.pallas_call(
        kernel,
        out_shape=jax.ShapeDtypeStruct((B * Lq, E), src.dtype),
        grid_spec=grid_spec,
        compiler_params=pltpu.CompilerParams(dimension_semantics=("parallel",)),
        cost_estimate=cost,
    )(src2, gf2, wq_t, bq, wkv_t, bkv, wo_t, bo, gamma, beta, hmask, ones_blk, bias)

    return out2.reshape(B, Lq, E)


def _reference(src, graph_feat, params, *, num_heads):
    """Plain-JAX reference mirroring nn.MultiheadAttention + residual + LayerNorm (eval)."""
    B, Lq, E = src.shape
    dh = E // num_heads
    q = src @ params["wq"].T + params["bq"][0]
    k = graph_feat @ params["wk"].T + params["bk"][0]
    v = graph_feat @ params["wv"].T + params["bv"][0]

    def split(x):  # (B, L, E) -> (B, H, L, dh)
        Bx, L, _ = x.shape
        return x.reshape(Bx, L, num_heads, dh).transpose(0, 2, 1, 3)

    qh, kh, vh = split(q), split(k), split(v)
    s = jnp.einsum("bhqd,bhkd->bhqk", qh, kh) / math.sqrt(dh)
    p = jax.nn.softmax(s, axis=-1)
    ctx = jnp.einsum("bhqk,bhkd->bhqd", p, vh)
    ctx = ctx.transpose(0, 2, 1, 3).reshape(B, Lq, E)
    attn_out = ctx @ params["wo"].T + params["bo"][0]
    resid = src + attn_out
    mean = jnp.mean(resid, axis=-1, keepdims=True)
    var = jnp.mean((resid - mean) ** 2, axis=-1, keepdims=True)
    normed = (resid - mean) / jnp.sqrt(var + 1e-5)
    return normed * params["gamma"][0] + params["beta"][0]


def init_params(key, embed_dim):
    E = embed_dim
    ks = jax.random.split(key, 5)
    scale = 1.0 / math.sqrt(E)
    # nn.MultiheadAttention packs q/k/v into in_proj_weight (3E, E); we keep them split.
    in_proj_w = jax.random.uniform(ks[0], (3 * E, E), jnp.float32, -scale, scale)
    in_proj_b = jax.random.uniform(ks[1], (3 * E,), jnp.float32, -scale, scale)
    wo = jax.random.uniform(ks[2], (E, E), jnp.float32, -scale, scale)
    bo = jax.random.uniform(ks[3], (E,), jnp.float32, -scale, scale)
    return {
        "wq": in_proj_w[0 * E:1 * E],
        "wk": in_proj_w[1 * E:2 * E],
        "wv": in_proj_w[2 * E:3 * E],
        "bq": in_proj_b[0 * E:1 * E].reshape(1, E),
        "bk": in_proj_b[1 * E:2 * E].reshape(1, E),
        "bv": in_proj_b[2 * E:3 * E].reshape(1, E),
        "wo": wo,
        "bo": bo.reshape(1, E),
        "gamma": jnp.ones((1, E), jnp.float32),
        "beta": jnp.zeros((1, E), jnp.float32),
    }


if __name__ == "__main__":
    Lq, Lk, E, H = 8, 8, 32, 4
    key = jax.random.PRNGKey(0)
    k_src, k_gf, k_par = jax.random.split(key, 3)
    params = init_params(k_par, E)

    # Case 1: module-scale shapes (B=2 -> 1 batch element per step, 2 parallel grid steps).
    B = 2
    src = jax.random.normal(k_src, (B, Lq, E), jnp.float32)
    graph_feat = jax.random.normal(k_gf, (B, Lk, E), jnp.float32)
    out = jax.block_until_ready(cross_attention_layer(src, graph_feat, params, num_heads=H))
    ref = _reference(src, graph_feat, params, num_heads=H)
    assert out.shape == (B, Lq, E)
    assert jnp.allclose(out, ref, atol=2e-4, rtol=2e-4), \
        f"mismatch vs reference (B=2), max abs err {jnp.max(jnp.abs(out - ref))}"

    # Case 2: larger batch exercising the multi-batch-per-step (bt>1) masked path.
    B2 = 8
    src2 = jax.random.normal(jax.random.PRNGKey(1), (B2, Lq, E), jnp.float32)
    gf2 = jax.random.normal(jax.random.PRNGKey(2), (B2, Lk, E), jnp.float32)
    out2 = jax.block_until_ready(cross_attention_layer(src2, gf2, params, num_heads=H))
    ref2 = _reference(src2, gf2, params, num_heads=H)
    assert jnp.allclose(out2, ref2, atol=2e-4, rtol=2e-4), \
        f"mismatch vs reference (B=8), max abs err {jnp.max(jnp.abs(out2 - ref2))}"

    print("KERNEL_OK")
</pallas_src>

<mosaic_0001>
module attributes {stable_mosaic.version = 11 : i64} {
  func.func @_cross_attn_kernel(%arg0: i32, %arg1: memref<8x32xf32, #tpu.memory_space<vmem>>, %arg2: memref<8x32xf32, #tpu.memory_space<vmem>>, %arg3: memref<32x32xf32, #tpu.memory_space<vmem>>, %arg4: memref<1x32xf32, #tpu.memory_space<vmem>>, %arg5: memref<32x64xf32, #tpu.memory_space<vmem>>, %arg6: memref<1x64xf32, #tpu.memory_space<vmem>>, %arg7: memref<32x32xf32, #tpu.memory_space<vmem>>, %arg8: memref<1x32xf32, #tpu.memory_space<vmem>>, %arg9: memref<1x32xf32, #tpu.memory_space<vmem>>, %arg10: memref<1x32xf32, #tpu.memory_space<vmem>>, %arg11: memref<32x64xf32, #tpu.memory_space<vmem>>, %arg12: memref<32x32xf32, #tpu.memory_space<vmem>>, %arg13: memref<8x32xf32, #tpu.memory_space<vmem>>, %arg14: memref<8x32xf32, #tpu.memory_space<vmem>>) attributes {dimension_semantics = [#tpu.dimension_semantics<parallel>], iteration_bounds = array<i64: 2>, scalar_prefetch = 0 : i64, scratch_operands = 0 : i64, tpu.core_type = #tpu.core_type<tc>, window_params = [{transform_indices = @transform_0, window_bounds = array<i64: 8, 32>}, {transform_indices = @transform_1, window_bounds = array<i64: 8, 32>}, {pipeline_mode = #tpu.pipeline_mode<synchronous>, transform_indices = @transform_2, window_bounds = array<i64: 32, 32>}, {pipeline_mode = #tpu.pipeline_mode<synchronous>, transform_indices = @transform_3, window_bounds = array<i64: 1, 32>}, {pipeline_mode = #tpu.pipeline_mode<synchronous>, transform_indices = @transform_4, window_bounds = array<i64: 32, 64>}, {pipeline_mode = #tpu.pipeline_mode<synchronous>, transform_indices = @transform_5, window_bounds = array<i64: 1, 64>}, {pipeline_mode = #tpu.pipeline_mode<synchronous>, transform_indices = @transform_6, window_bounds = array<i64: 32, 32>}, {pipeline_mode = #tpu.pipeline_mode<synchronous>, transform_indices = @transform_7, window_bounds = array<i64: 1, 32>}, {pipeline_mode = #tpu.pipeline_mode<synchronous>, transform_indices = @transform_8, window_bounds = array<i64: 1, 32>}, {pipeline_mode = #tpu.pipeline_mode<synchronous>, transform_indices = @transform_9, window_bounds = array<i64: 1, 32>}, {pipeline_mode = #tpu.pipeline_mode<synchronous>, transform_indices = @transform_10, window_bounds = array<i64: 32, 64>}, {pipeline_mode = #tpu.pipeline_mode<synchronous>, transform_indices = @transform_11, window_bounds = array<i64: 32, 32>}, {pipeline_mode = #tpu.pipeline_mode<synchronous>, transform_indices = @transform_12, window_bounds = array<i64: 8, 32>}, {transform_indices = @transform_13, window_bounds = array<i64: 8, 32>}]} {
    %c0 = arith.constant 0 : index
    %c0_0 = arith.constant 0 : index
    %0 = vector.load %arg1[%c0, %c0_0] : memref<8x32xf32, #tpu.memory_space<vmem>>, vector<8x32xf32>
    %c0_1 = arith.constant 0 : index
    %c0_2 = arith.constant 0 : index
    %1 = vector.load %arg3[%c0_1, %c0_2] : memref<32x32xf32, #tpu.memory_space<vmem>>, vector<32x32xf32>
    %cst = arith.constant dense<0.000000e+00> : vector<8x32xf32>
    %2 = tpu.matmul %0, %1, %cst {dimension_numbers = #tpu.dot_dimension_numbers<[1], [0], [0], [1], [0, 0, 1, 1], [], []>} : vector<8x32xf32>, vector<32x32xf32>, vector<8x32xf32> -> vector<8x32xf32>
    %c0_3 = arith.constant 0 : index
    %c0_4 = arith.constant 0 : index
    %3 = vector.load %arg4[%c0_3, %c0_4] : memref<1x32xf32, #tpu.memory_space<vmem>>, vector<1x32xf32>
    %4 = vector.broadcast %3 : vector<1x32xf32> to vector<8x32xf32>
    %5 = arith.addf %2, %4 : vector<8x32xf32>
    %c0_5 = arith.constant 0 : index
    %c0_6 = arith.constant 0 : index
    %6 = vector.load %arg2[%c0_5, %c0_6] : memref<8x32xf32, #tpu.memory_space<vmem>>, vector<8x32xf32>
    %c0_7 = arith.constant 0 : index
    %c0_8 = arith.constant 0 : index
    %7 = vector.load %arg5[%c0_7, %c0_8] : memref<32x64xf32, #tpu.memory_space<vmem>>, vector<32x64xf32>
    %cst_9 = arith.constant dense<0.000000e+00> : vector<8x64xf32>
    %8 = tpu.matmul %6, %7, %cst_9 {dimension_numbers = #tpu.dot_dimension_numbers<[1], [0], [0], [1], [0, 0, 1, 1], [], []>} : vector<8x32xf32>, vector<32x64xf32>, vector<8x64xf32> -> vector<8x64xf32>
    %c0_10 = arith.constant 0 : index
    %c0_11 = arith.constant 0 : index
    %9 = vector.load %arg6[%c0_10, %c0_11] : memref<1x64xf32, #tpu.memory_space<vmem>>, vector<1x64xf32>
    %10 = vector.broadcast %9 : vector<1x64xf32> to vector<8x64xf32>
    %11 = arith.addf %8, %10 : vector<8x64xf32>
    %12 = tpu.concatenate %11, %11, %11, %11 in 0 : vector<8x64xf32>, vector<8x64xf32>, vector<8x64xf32>, vector<8x64xf32> -> vector<32x64xf32>
    %c0_12 = arith.constant 0 : index
    %c0_13 = arith.constant 0 : index
    %13 = vector.load %arg11[%c0_12, %c0_13] : memref<32x64xf32, #tpu.memory_space<vmem>>, vector<32x64xf32>
    %14 = arith.mulf %12, %13 : vector<32x64xf32>
    %15 = vector.extract_strided_slice %14 {offsets = [0, 0], sizes = [32, 32], strides = [1, 1]} : vector<32x64xf32> to vector<32x32xf32>
    %16 = vector.extract_strided_slice %14 {offsets = [0, 32], sizes = [32, 32], strides = [1, 1]} : vector<32x64xf32> to vector<32x32xf32>
    "tpu.trace_start"() <{level = 10 : i32, message = "qe,ce->qc"}> : () -> ()
    %cst_14 = arith.constant dense<0.000000e+00> : vector<8x32xf32>
    %17 = tpu.matmul %5, %15, %cst_14 {dimension_numbers = #tpu.dot_dimension_numbers<[1], [1], [0], [0], [0, 0, 1, 0], [], []>} : vector<8x32xf32>, vector<32x32xf32>, vector<8x32xf32> -> vector<8x32xf32>
    "tpu.trace_stop"() : () -> ()
    %cst_15 = arith.constant 0.353553385 : f32
    %18 = vector.broadcast %cst_15 : f32 to vector<8x32xf32>
    %19 = arith.mulf %17, %18 : vector<8x32xf32>
    %c0_16 = arith.constant 0 : index
    %c0_17 = arith.constant 0 : index
    %20 = vector.load %arg13[%c0_16, %c0_17] : memref<8x32xf32, #tpu.memory_space<vmem>>, vector<8x32xf32>
    %21 = arith.addf %19, %20 : vector<8x32xf32>
    %cst_18 = arith.constant dense<0xFF800000> : vector<8xf32>
    %22 = vector.multi_reduction <maximumf>, %21, %cst_18 [1] : vector<8x32xf32> to vector<8xf32>
    %23 = vector.shape_cast %22 : vector<8xf32> to vector<8x1xf32>
    %24 = vector.broadcast %23 : vector<8x1xf32> to vector<8x32xf32>
    %25 = arith.subf %21, %24 : vector<8x32xf32>
    %26 = math.exp %25 : vector<8x32xf32>
    %c0_19 = arith.constant 0 : index
    %c0_20 = arith.constant 0 : index
    %27 = vector.load %arg12[%c0_19, %c0_20] : memref<32x32xf32, #tpu.memory_space<vmem>>, vector<32x32xf32>
    %cst_21 = arith.constant dense<0.000000e+00> : vector<8x32xf32>
    %28 = tpu.matmul %26, %27, %cst_21 {dimension_numbers = #tpu.dot_dimension_numbers<[1], [0], [0], [1], [0, 0, 1, 1], [], []>} : vector<8x32xf32>, vector<32x32xf32>, vector<8x32xf32> -> vector<8x32xf32>
    %cst_22 = arith.constant 1.000000e-30 : f32
    %29 = vector.broadcast %cst_22 : f32 to vector<8x32xf32>
    %30 = arith.maximumf %28, %29 : vector<8x32xf32>
    %31 = tpu.reciprocal %30 {approx = true} : vector<8x32xf32> -> vector<8x32xf32>
    %32 = arith.mulf %30, %31 : vector<8x32xf32>
    %cst_23 = arith.constant 2.000000e+00 : f32
    %33 = vector.broadcast %cst_23 : f32 to vector<8x32xf32>
    %34 = arith.subf %33, %32 : vector<8x32xf32>
    %35 = arith.mulf %31, %34 : vector<8x32xf32>
    %36 = arith.mulf %26, %35 : vector<8x32xf32>
    %cst_24 = arith.constant dense<0.000000e+00> : vector<8x32xf32>
    %37 = tpu.matmul %36, %16, %cst_24 {dimension_numbers = #tpu.dot_dimension_numbers<[1], [0], [0], [1], [0, 0, 1, 1], [], []>} : vector<8x32xf32>, vector<32x32xf32>, vector<8x32xf32> -> vector<8x32xf32>
    %c0_25 = arith.constant 0 : index
    %c0_26 = arith.constant 0 : index
    %38 = vector.load %arg7[%c0_25, %c0_26] : memref<32x32xf32, #tpu.memory_space<vmem>>, vector<32x32xf32>
    %cst_27 = arith.constant dense<0.000000e+00> : vector<8x32xf32>
    %39 = tpu.matmul %37, %38, %cst_27 {dimension_numbers = #tpu.dot_dimension_numbers<[1], [0], [0], [1], [0, 0, 1, 1], [], []>} : vector<8x32xf32>, vector<32x32xf32>, vector<8x32xf32> -> vector<8x32xf32>
    %c0_28 = arith.constant 0 : index
    %c0_29 = arith.constant 0 : index
    %40 = vector.load %arg8[%c0_28, %c0_29] : memref<1x32xf32, #tpu.memory_space<vmem>>, vector<1x32xf32>
    %41 = vector.broadcast %40 : vector<1x32xf32> to vector<8x32xf32>
    %42 = arith.addf %39, %41 : vector<8x32xf32>
    %c0_30 = arith.constant 0 : index
    %c0_31 = arith.constant 0 : index
    %43 = vector.load %arg1[%c0_30, %c0_31] : memref<8x32xf32, #tpu.memory_space<vmem>>, vector<8x32xf32>
    %44 = arith.addf %43, %42 : vector<8x32xf32>
    %cst_32 = arith.constant dense<0.000000e+00> : vector<8xf32>
    %45 = vector.multi_reduction <add>, %44, %cst_32 [1] : vector<8x32xf32> to vector<8xf32>
    %46 = vector.shape_cast %45 : vector<8xf32> to vector<8x1xf32>
    %cst_33 = arith.constant 3.200000e+01 : f32
    %47 = vector.broadcast %cst_33 : f32 to vector<8x1xf32>
    %48 = arith.divf %46, %47 : vector<8x1xf32>
    %49 = vector.broadcast %48 : vector<8x1xf32> to vector<8x32xf32>
    %50 = arith.subf %44, %49 : vector<8x32xf32>
    %51 = arith.mulf %50, %50 : vector<8x32xf32>
    %cst_34 = arith.constant dense<0.000000e+00> : vector<8xf32>
    %52 = vector.multi_reduction <add>, %51, %cst_34 [1] : vector<8x32xf32> to vector<8xf32>
    %53 = vector.shape_cast %52 : vector<8xf32> to vector<8x1xf32>
    %cst_35 = arith.constant 3.200000e+01 : f32
    %54 = vector.broadcast %cst_35 : f32 to vector<8x1xf32>
    %55 = arith.divf %53, %54 : vector<8x1xf32>
    %56 = vector.broadcast %48 : vector<8x1xf32> to vector<8x32xf32>
    %57 = arith.subf %44, %56 : vector<8x32xf32>
    %cst_36 = arith.constant 9.99999974E-6 : f32
    %58 = vector.broadcast %cst_36 : f32 to vector<8x1xf32>
    %59 = arith.addf %55, %58 : vector<8x1xf32>
    %60 = math.rsqrt %59 : vector<8x1xf32>
    %61 = vector.broadcast %60 : vector<8x1xf32> to vector<8x32xf32>
    %62 = arith.mulf %57, %61 : vector<8x32xf32>
    %c0_37 = arith.constant 0 : index
    %c0_38 = arith.constant 0 : index
    %63 = vector.load %arg9[%c0_37, %c0_38] : memref<1x32xf32, #tpu.memory_space<vmem>>, vector<1x32xf32>
    %64 = vector.broadcast %63 : vector<1x32xf32> to vector<8x32xf32>
    %65 = arith.mulf %62, %64 : vector<8x32xf32>
    %c0_39 = arith.constant 0 : index
    %c0_40 = arith.constant 0 : index
    %66 = vector.load %arg10[%c0_39, %c0_40] : memref<1x32xf32, #tpu.memory_space<vmem>>, vector<1x32xf32>
    %67 = vector.broadcast %66 : vector<1x32xf32> to vector<8x32xf32>
    %68 = arith.addf %65, %67 : vector<8x32xf32>
    %c0_41 = arith.constant 0 : index
    %c0_42 = arith.constant 0 : index
    %69 = vector.load %arg14[%c0_41, %c0_42] : memref<8x32xf32, #tpu.memory_space<vmem>>, vector<8x32xf32>
    tpu.vector_store %arg14[%c0_41, %c0_42], %68 {strides = array<i32>} : memref<8x32xf32, #tpu.memory_space<vmem>>, vector<8x32xf32>,
    return
  }
  func.func @transform_0(%arg0: i32) -> (i32, i32) {
    %c0_i32 = arith.constant 0 : i32
    %c0_i32_0 = arith.constant 0 : i32
    return %arg0, %c0_i32 : i32, i32
  }
  func.func @transform_1(%arg0: i32) -> (i32, i32) {
    %c0_i32 = arith.constant 0 : i32
    %c0_i32_0 = arith.constant 0 : i32
    return %arg0, %c0_i32 : i32, i32
  }
  func.func @transform_2(%arg0: i32) -> (i32, i32) {
    %c0_i32 = arith.constant 0 : i32
    %c0_i32_0 = arith.constant 0 : i32
    %c0_i32_1 = arith.constant 0 : i32
    return %c0_i32, %c0_i32_0 : i32, i32
  }
  func.func @transform_3(%arg0: i32) -> (i32, i32) {
    %c0_i32 = arith.constant 0 : i32
    %c0_i32_0 = arith.constant 0 : i32
    %c0_i32_1 = arith.constant 0 : i32
    return %c0_i32, %c0_i32_0 : i32, i32
  }
  func.func @transform_4(%arg0: i32) -> (i32, i32) {
    %c0_i32 = arith.constant 0 : i32
    %c0_i32_0 = arith.constant 0 : i32
    %c0_i32_1 = arith.constant 0 : i32
    return %c0_i32, %c0_i32_0 : i32, i32
  }
  func.func @transform_5(%arg0: i32) -> (i32, i32) {
    %c0_i32 = arith.constant 0 : i32
    %c0_i32_0 = arith.constant 0 : i32
    %c0_i32_1 = arith.constant 0 : i32
    return %c0_i32, %c0_i32_0 : i32, i32
  }
  func.func @transform_6(%arg0: i32) -> (i32, i32) {
    %c0_i32 = arith.constant 0 : i32
    %c0_i32_0 = arith.constant 0 : i32
    %c0_i32_1 = arith.constant 0 : i32
    return %c0_i32, %c0_i32_0 : i32, i32
  }
  func.func @transform_7(%arg0: i32) -> (i32, i32) {
    %c0_i32 = arith.constant 0 : i32
    %c0_i32_0 = arith.constant 0 : i32
    %c0_i32_1 = arith.constant 0 : i32
    return %c0_i32, %c0_i32_0 : i32, i32
  }
  func.func @transform_8(%arg0: i32) -> (i32, i32) {
    %c0_i32 = arith.constant 0 : i32
    %c0_i32_0 = arith.constant 0 : i32
    %c0_i32_1 = arith.constant 0 : i32
    return %c0_i32, %c0_i32_0 : i32, i32
  }
  func.func @transform_9(%arg0: i32) -> (i32, i32) {
    %c0_i32 = arith.constant 0 : i32
    %c0_i32_0 = arith.constant 0 : i32
    %c0_i32_1 = arith.constant 0 : i32
    return %c0_i32, %c0_i32_0 : i32, i32
  }
  func.func @transform_10(%arg0: i32) -> (i32, i32) {
    %c0_i32 = arith.constant 0 : i32
    %c0_i32_0 = arith.constant 0 : i32
    %c0_i32_1 = arith.constant 0 : i32
    return %c0_i32, %c0_i32_0 : i32, i32
  }
  func.func @transform_11(%arg0: i32) -> (i32, i32) {
    %c0_i32 = arith.constant 0 : i32
    %c0_i32_0 = arith.constant 0 : i32
    %c0_i32_1 = arith.constant 0 : i32
    return %c0_i32, %c0_i32_0 : i32, i32
  }
  func.func @transform_12(%arg0: i32) -> (i32, i32) {
    %c0_i32 = arith.constant 0 : i32
    %c0_i32_0 = arith.constant 0 : i32
    %c0_i32_1 = arith.constant 0 : i32
    return %c0_i32, %c0_i32_0 : i32, i32
  }
  func.func @transform_13(%arg0: i32) -> (i32, i32) {
    %c0_i32 = arith.constant 0 : i32
    %c0_i32_0 = arith.constant 0 : i32
    return %arg0, %c0_i32 : i32, i32
  }
}

</mosaic_0001>

<llo_original>
// kernel: tpu_custom_call.1
$region0: #{tpu_custom_call.1}
  #allocation0 [shape = 'u32[]', space=smem, size = 0x4, offset = 0x4, fixed_abs, tag = 'smem constant byte address 0x4 - core index']
  #allocation1 [shape = 'u32[144,128]{1,0:T(1,128)}', space=vmem, size = 0x12000, scoped, tag = 'internal scratch']
  %s0 = inlined_call_operand.hbm [shape: f32[16,32], index: 0, kind: input, shape index: {}]
  %s1 = inlined_call_operand.hbm [shape: f32[16,32], index: 1, kind: input, shape index: {}]
  %s2 = inlined_call_operand.hbm [shape: f32[32,32], index: 2, kind: input, shape index: {}]
  %s3 = inlined_call_operand.vmem [shape: f32[1,32], index: 3, kind: input, shape index: {}]
  %s4 = inlined_call_operand.hbm [shape: f32[32,64], index: 4, kind: input, shape index: {}]
  %s5 = inlined_call_operand.hbm [shape: f32[1,64], index: 5, kind: input, shape index: {}]
  %s6 = inlined_call_operand.hbm [shape: f32[32,32], index: 6, kind: input, shape index: {}]
  %s7 = inlined_call_operand.hbm [shape: f32[1,32], index: 7, kind: input, shape index: {}]
  %s8 = inlined_call_operand.hbm [shape: f32[1,32], index: 8, kind: input, shape index: {}]
  %s9 = inlined_call_operand.hbm [shape: f32[1,32], index: 9, kind: input, shape index: {}]
  %s10 = inlined_call_operand.vmem [shape: f32[32,64], index: 10, kind: input, shape index: {}]
  %s11 = inlined_call_operand.hbm [shape: f32[32,32], index: 11, kind: input, shape index: {}]
  %s12 = inlined_call_operand.vmem [shape: f32[8,32], index: 12, kind: input, shape index: {}]
  %s13 = inlined_call_operand.hbm [shape: f32[16,32], index: 13, kind: output, shape index: {}]
  %s14 = sld [smem:[#allocation0]]
  $region125: #{tpu_custom_call.1} parent=0
    _
  %s16 = ssub.s32 1, %s14
  %s17 = scalar_select 0, %s16, %s14
  $region1: #{tpu_custom_call.1} parent=0
    #allocation2 [shape = 'u8[8192]{0}', space=vmem, size = 0x2000, scoped, tag = 'input window, operand 0']
    #allocation3 [shape = 's32[2]{0}', space=sflag, size = 0x8, scoped, tag = 'scoped memory for tpu_custom_call.1']
    #allocation4 [shape = 's32[2]{0}', space=sflag, size = 0x8, scoped, tag = 'scoped memory for tpu_custom_call.1']
    #allocation5 [shape = 'u8[8192]{0}', space=vmem, size = 0x2000, scoped, tag = 'input window, operand 1']
    #allocation6 [shape = 's32[2]{0}', space=sflag, size = 0x8, scoped, tag = 'scoped memory for tpu_custom_call.1']
    #allocation7 [shape = 'u8[16384]{0}', space=vmem, size = 0x4000, scoped, tag = 'input window, operand 2, single buffered']
    #allocation8 [shape = 'u8[16384]{0}', space=vmem, size = 0x4000, scoped, tag = 'input window, operand 4, single buffered']
    #allocation9 [shape = 's32[1]{0}', space=sflag, size = 0x4, scoped, tag = 'scoped memory for tpu_custom_call.1']
    #allocation10 [shape = 'u8[512]{0}', space=vmem, size = 0x400, scoped, tag = 'input window, operand 5, single buffered']
    #allocation11 [shape = 'u8[16384]{0}', space=vmem, size = 0x4000, scoped, tag = 'input window, operand 6, single buffered']
    #allocation12 [shape = 's32[1]{0}', space=sflag, size = 0x4, scoped, tag = 'scoped memory for tpu_custom_call.1']
    #allocation13 [shape = 'u8[512]{0}', space=vmem, size = 0x400, scoped, tag = 'input window, operand 7, single buffered']
    #allocation14 [shape = 'u8[512]{0}', space=vmem, size = 0x400, scoped, tag = 'input window, operand 8, single buffered']
    #allocation15 [shape = 's32[1]{0}', space=sflag, size = 0x4, scoped, tag = 'scoped memory for tpu_custom_call.1']
    #allocation16 [shape = 'u8[512]{0}', space=vmem, size = 0x400, scoped, tag = 'input window, operand 9, single buffered']
    #allocation17 [shape = 'u8[16384]{0}', space=vmem, size = 0x4000, scoped, tag = 'input window, operand 11, single buffered']
    #allocation18 [shape = 's32[1]{0}', space=sflag, size = 0x4, scoped, tag = 'scoped memory for tpu_custom_call.1']
    #allocation19 [shape = 'u8[8192]{0}', space=vmem, size = 0x2000, scoped, tag = 'output window, operand 0']
    %18 = vsyncpa [#allocation3], 0
    %s19 = scalar_lea.sflag [#allocation3], 1
    %20 = vsyncpa %s19, 0
    %21 = vsyncpa [#allocation6], 0
    %s22 = scalar_lea.sflag [#allocation6], 1
    %23 = vsyncpa %s22, 0
    %24 = vsyncpa [#allocation9], 0
    %25 = vsyncpa [#allocation12], 0
    %26 = vsyncpa [#allocation15], 0
    %27 = vsyncpa [#allocation18], 0
    %28 = vsyncpa [#allocation4], 0
    %s29 = scalar_lea.sflag [#allocation4], 1
    %30 = vsyncpa %s29, 0
    loop: start=0, step=1, limit=4
    $region2: #{tpu_custom_call.1} parent=1 // loop_pre_header
      _
    $region3: #{tpu_custom_call.1} parent=1 // loop_header
      %s32 = sphi 0, %s36
      %p33 = scmp.ge.s32.totalorder %s32, 4
      %s42 = sphi 0, %s44
      %s45 = sphi 0, %s42
      %s46 = sphi 0, %s45
      %s62 = sphi 0, %s46
      %s68 = sphi 0, %s70
      %s71 = sphi 0, %s68
      %s72 = sphi 0, %s71
      %s88 = sphi 0, %s72
      %s92 = sphi 0, %s92
      %s94 = sphi 0, %s92
      %s95 = sphi 0, %s94
      %s109 = sphi 0, %s95
      %s113 = sphi 0, %s113
      %s115 = sphi 0, %s113
      %s116 = sphi 0, %s115
      %s130 = sphi 0, %s116
      %s134 = sphi 0, %s134
      %s136 = sphi 0, %s134
      %s137 = sphi 0, %s136
      %s151 = sphi 0, %s137
      %s155 = sphi 0, %s155
      %s157 = sphi 0, %s155
      %s158 = sphi 0, %s157
      %s172 = sphi 0, %s158
      %s176 = sphi 0, %s176
      %s178 = sphi 0, %s176
      %s179 = sphi 0, %s178
      %s193 = sphi 0, %s179
      %s197 = sphi 0, %s197
      %s199 = sphi 0, %s197
      %s200 = sphi 0, %s199
      %s214 = sphi 0, %s200
      %s218 = sphi 0, %s218
      %s220 = sphi 0, %s218
      %s221 = sphi 0, %s220
      %s235 = sphi 0, %s221
      %s239 = sphi 0, %s239
      %s241 = sphi 0, %s239
      %s242 = sphi 0, %s241
      %s256 = sphi 0, %s242
      %s260 = sphi 0, %s260
      %s262 = sphi 0, %s260
      %s263 = sphi 0, %s262
      %s277 = sphi 0, %s263
      %s281 = sphi 0, %s281
      %s283 = sphi 0, %s281
      %s284 = sphi 0, %s283
      %s298 = sphi 0, %s284
      %s302 = sphi 0, %s302
      %s304 = sphi 0, %s302
      %s305 = sphi 0, %s304
      %s319 = sphi 0, %s305
      %s325 = sphi 0, %s327
      %s328 = sphi 0, %s325
      %s329 = sphi 0, %s328
      %s345 = sphi 0, %s329
    $region4: #{tpu_custom_call.1} parent=1 // loop_header_branch
      %35 = sbr.rel (%p33) target = $region8
    $region5: #{tpu_custom_call.1} parent=1 // loop_body
      %s37 = ssub.s32 %s32, 1
      %s38 = ssub.s32 %s32, 2
      %s39 = sadd.s32 %s32, 1
      %s40 = ssub.s32 %s32, %s39
      %p41 = scmp.eq.s32.totalorder %s40, 0
      %s43 = sadd.s32 %s42, 1
      %s44 = scalar_select %p41, %s42, %s43
      %p47 = pneg %p41
      %p48 = scmp.eq.s32.totalorder %s32, 1
      %p49 = por %p47, %p48
      %p50 = scmp.ne.s32.totalorder %s42, %s45
      %p51 = scmp.eq.s32.totalorder %s32, 0
      %p52 = por %p50, %p51
      %p53 = scmp.ne.s32.totalorder %s42, %s45
      %p54 = scmp.eq.s32.totalorder %s37, 1
      %p55 = por %p53, %p54
      %p56 = scmp.ne.s32.totalorder %s45, %s46
      %p57 = scmp.eq.s32.totalorder %s37, 0
      %p58 = por %p56, %p57
      %p59 = scmp.ne.s32.totalorder %s45, %s46
      %p60 = scmp.eq.s32.totalorder %s38, 1
      %p61 = por %p59, %p60
      %p63 = scmp.ne.s32.totalorder %s46, %s62
      %p64 = scmp.eq.s32.totalorder %s38, 0
      %p65 = por %p63, %p64
      %s66 = ssub.s32 %s32, %s39
      %p67 = scmp.eq.s32.totalorder %s66, 0
      %s69 = sadd.s32 %s68, 1
      %s70 = scalar_select %p67, %s68, %s69
      %p73 = pneg %p67
      %p74 = scmp.eq.s32.totalorder %s32, 1
      %p75 = por %p73, %p74
      %p76 = scmp.ne.s32.totalorder %s68, %s71
      %p77 = scmp.eq.s32.totalorder %s32, 0
      %p78 = por %p76, %p77
      %p79 = scmp.ne.s32.totalorder %s68, %s71
      %p80 = scmp.eq.s32.totalorder %s37, 1
      %p81 = por %p79, %p80
      %p82 = scmp.ne.s32.totalorder %s71, %s72
      %p83 = scmp.eq.s32.totalorder %s37, 0
      %p84 = por %p82, %p83
      %p85 = scmp.ne.s32.totalorder %s71, %s72
      %p86 = scmp.eq.s32.totalorder %s38, 1
      %p87 = por %p85, %p86
      %p89 = scmp.ne.s32.totalorder %s72, %s88
      %p90 = scmp.eq.s32.totalorder %s38, 0
      %p91 = por %p89, %p90
      %s93 = sadd.s32 %s92, 1
      %p96 = scmp.eq.s32.totalorder %s32, 1
      %p97 = scmp.ne.s32.totalorder %s92, %s94
      %p98 = scmp.eq.s32.totalorder %s32, 0
      %p99 = por %p97, %p98
      %p100 = scmp.ne.s32.totalorder %s92, %s94
      %p101 = scmp.eq.s32.totalorder %s37, 1
      %p102 = por %p100, %p101
      %p103 = scmp.ne.s32.totalorder %s94, %s95
      %p104 = scmp.eq.s32.totalorder %s37, 0
      %p105 = por %p103, %p104
      %p106 = scmp.ne.s32.totalorder %s94, %s95
      %p107 = scmp.eq.s32.totalorder %s38, 1
      %p108 = por %p106, %p107
      %p110 = scmp.ne.s32.totalorder %s95, %s109
      %p111 = scmp.eq.s32.totalorder %s38, 0
      %p112 = por %p110, %p111
      %s114 = sadd.s32 %s113, 1
      %p117 = scmp.eq.s32.totalorder %s32, 1
      %p118 = scmp.ne.s32.totalorder %s113, %s115
      %p119 = scmp.eq.s32.totalorder %s32, 0
      %p120 = por %p118, %p119
      %p121 = scmp.ne.s32.totalorder %s113, %s115
      %p122 = scmp.eq.s32.totalorder %s37, 1
      %p123 = por %p121, %p122
      %p124 = scmp.ne.s32.totalorder %s115, %s116
      %p125 = scmp.eq.s32.totalorder %s37, 0
      %p126 = por %p124, %p125
      %p127 = scmp.ne.s32.totalorder %s115, %s116
      %p128 = scmp.eq.s32.totalorder %s38, 1
      %p129 = por %p127, %p128
      %p131 = scmp.ne.s32.totalorder %s116, %s130
      %p132 = scmp.eq.s32.totalorder %s38, 0
      %p133 = por %p131, %p132
      %s135 = sadd.s32 %s134, 1
      %p138 = scmp.eq.s32.totalorder %s32, 1
      %p139 = scmp.ne.s32.totalorder %s134, %s136
      %p140 = scmp.eq.s32.totalorder %s32, 0
      %p141 = por %p139, %p140
      %p142 = scmp.ne.s32.totalorder %s134, %s136
      %p143 = scmp.eq.s32.totalorder %s37, 1
      %p144 = por %p142, %p143
      %p145 = scmp.ne.s32.totalorder %s136, %s137
      %p146 = scmp.eq.s32.totalorder %s37, 0
      %p147 = por %p145, %p146
      %p148 = scmp.ne.s32.totalorder %s136, %s137
      %p149 = scmp.eq.s32.totalorder %s38, 1
      %p150 = por %p148, %p149
      %p152 = scmp.ne.s32.totalorder %s137, %s151
      %p153 = scmp.eq.s32.totalorder %s38, 0
      %p154 = por %p152, %p153
      %s156 = sadd.s32 %s155, 1
      %p159 = scmp.eq.s32.totalorder %s32, 1
      %p160 = scmp.ne.s32.totalorder %s155, %s157
      %p161 = scmp.eq.s32.totalorder %s32, 0
      %p162 = por %p160, %p161
      %p163 = scmp.ne.s32.totalorder %s155, %s157
      %p164 = scmp.eq.s32.totalorder %s37, 1
      %p165 = por %p163, %p164
      %p166 = scmp.ne.s32.totalorder %s157, %s158
      %p167 = scmp.eq.s32.totalorder %s37, 0
      %p168 = por %p166, %p167
      %p169 = scmp.ne.s32.totalorder %s157, %s158
      %p170 = scmp.eq.s32.totalorder %s38, 1
      %p171 = por %p169, %p170
      %p173 = scmp.ne.s32.totalorder %s158, %s172
      %p174 = scmp.eq.s32.totalorder %s38, 0
      %p175 = por %p173, %p174
      %s177 = sadd.s32 %s176, 1
      %p180 = scmp.eq.s32.totalorder %s32, 1
      %p181 = scmp.ne.s32.totalorder %s176, %s178
      %p182 = scmp.eq.s32.totalorder %s32, 0
      %p183 = por %p181, %p182
      %p184 = scmp.ne.s32.totalorder %s176, %s178
      %p185 = scmp.eq.s32.totalorder %s37, 1
      %p186 = por %p184, %p185
      %p187 = scmp.ne.s32.totalorder %s178, %s179
      %p188 = scmp.eq.s32.totalorder %s37, 0
      %p189 = por %p187, %p188
      %p190 = scmp.ne.s32.totalorder %s178, %s179
      %p191 = scmp.eq.s32.totalorder %s38, 1
      %p192 = por %p190, %p191
      %p194 = scmp.ne.s32.totalorder %s179, %s193
      %p195 = scmp.eq.s32.totalorder %s38, 0
      %p196 = por %p194, %p195
      %s198 = sadd.s32 %s197, 1
      %p201 = scmp.eq.s32.totalorder %s32, 1
      %p202 = scmp.ne.s32.totalorder %s197, %s199
      %p203 = scmp.eq.s32.totalorder %s32, 0
      %p204 = por %p202, %p203
      %p205 = scmp.ne.s32.totalorder %s197, %s199
      %p206 = scmp.eq.s32.totalorder %s37, 1
      %p207 = por %p205, %p206
      %p208 = scmp.ne.s32.totalorder %s199, %s200
      %p209 = scmp.eq.s32.totalorder %s37, 0
      %p210 = por %p208, %p209
      %p211 = scmp.ne.s32.totalorder %s199, %s200
      %p212 = scmp.eq.s32.totalorder %s38, 1
      %p213 = por %p211, %p212
      %p215 = scmp.ne.s32.totalorder %s200, %s214
      %p216 = scmp.eq.s32.totalorder %s38, 0
      %p217 = por %p215, %p216
      %s219 = sadd.s32 %s218, 1
      %p222 = scmp.eq.s32.totalorder %s32, 1
      %p223 = scmp.ne.s32.totalorder %s218, %s220
      %p224 = scmp.eq.s32.totalorder %s32, 0
      %p225 = por %p223, %p224
      %p226 = scmp.ne.s32.totalorder %s218, %s220
      %p227 = scmp.eq.s32.totalorder %s37, 1
      %p228 = por %p226, %p227
      %p229 = scmp.ne.s32.totalorder %s220, %s221
      %p230 = scmp.eq.s32.totalorder %s37, 0
      %p231 = por %p229, %p230
      %p232 = scmp.ne.s32.totalorder %s220, %s221
      %p233 = scmp.eq.s32.totalorder %s38, 1
      %p234 = por %p232, %p233
      %p236 = scmp.ne.s32.totalorder %s221, %s235
      %p237 = scmp.eq.s32.totalorder %s38, 0
      %p238 = por %p236, %p237
      %s240 = sadd.s32 %s239, 1
      %p243 = scmp.eq.s32.totalorder %s32, 1
      %p244 = scmp.ne.s32.totalorder %s239, %s241
      %p245 = scmp.eq.s32.totalorder %s32, 0
      %p246 = por %p244, %p245
      %p247 = scmp.ne.s32.totalorder %s239, %s241
      %p248 = scmp.eq.s32.totalorder %s37, 1
      %p249 = por %p247, %p248
      %p250 = scmp.ne.s32.totalorder %s241, %s242
      %p251 = scmp.eq.s32.totalorder %s37, 0
      %p252 = por %p250, %p251
      %p253 = scmp.ne.s32.totalorder %s241, %s242
      %p254 = scmp.eq.s32.totalorder %s38, 1
      %p255 = por %p253, %p254
      %p257 = scmp.ne.s32.totalorder %s242, %s256
      %p258 = scmp.eq.s32.totalorder %s38, 0
      %p259 = por %p257, %p258
      %s261 = sadd.s32 %s260, 1
      %p264 = scmp.eq.s32.totalorder %s32, 1
      %p265 = scmp.ne.s32.totalorder %s260, %s262
      %p266 = scmp.eq.s32.totalorder %s32, 0
      %p267 = por %p265, %p266
      %p268 = scmp.ne.s32.totalorder %s260, %s262
      %p269 = scmp.eq.s32.totalorder %s37, 1
      %p270 = por %p268, %p269
      %p271 = scmp.ne.s32.totalorder %s262, %s263
      %p272 = scmp.eq.s32.totalorder %s37, 0
      %p273 = por %p271, %p272
      %p274 = scmp.ne.s32.totalorder %s262, %s263
      %p275 = scmp.eq.s32.totalorder %s38, 1
      %p276 = por %p274, %p275
      %p278 = scmp.ne.s32.totalorder %s263, %s277
      %p279 = scmp.eq.s32.totalorder %s38, 0
      %p280 = por %p278, %p279
      %s282 = sadd.s32 %s281, 1
      %p285 = scmp.eq.s32.totalorder %s32, 1
      %p286 = scmp.ne.s32.totalorder %s281, %s283
      %p287 = scmp.eq.s32.totalorder %s32, 0
      %p288 = por %p286, %p287
      %p289 = scmp.ne.s32.totalorder %s281, %s283
      %p290 = scmp.eq.s32.totalorder %s37, 1
      %p291 = por %p289, %p290
      %p292 = scmp.ne.s32.totalorder %s283, %s284
      %p293 = scmp.eq.s32.totalorder %s37, 0
      %p294 = por %p292, %p293
      %p295 = scmp.ne.s32.totalorder %s283, %s284
      %p296 = scmp.eq.s32.totalorder %s38, 1
      %p297 = por %p295, %p296
      %p299 = scmp.ne.s32.totalorder %s284, %s298
      %p300 = scmp.eq.s32.totalorder %s38, 0
      %p301 = por %p299, %p300
      %s303 = sadd.s32 %s302, 1
      %p306 = scmp.eq.s32.totalorder %s32, 1
      %p307 = scmp.ne.s32.totalorder %s302, %s304
      %p308 = scmp.eq.s32.totalorder %s32, 0
      %p309 = por %p307, %p308
      %p310 = scmp.ne.s32.totalorder %s302, %s304
      %p311 = scmp.eq.s32.totalorder %s37, 1
      %p312 = por %p310, %p311
      %p313 = scmp.ne.s32.totalorder %s304, %s305
      %p314 = scmp.eq.s32.totalorder %s37, 0
      %p315 = por %p313, %p314
      %p316 = scmp.ne.s32.totalorder %s304, %s305
      %p317 = scmp.eq.s32.totalorder %s38, 1
      %p318 = por %p316, %p317
      %p320 = scmp.ne.s32.totalorder %s305, %s319
      %p321 = scmp.eq.s32.totalorder %s38, 0
      %p322 = por %p320, %p321
      %s323 = ssub.s32 %s32, %s39
      %p324 = scmp.eq.s32.totalorder %s323, 0
      %s326 = sadd.s32 %s325, 1
      %s327 = scalar_select %p324, %s325, %s326
      %p330 = pneg %p324
      %p331 = scmp.eq.s32.totalorder %s32, 1
      %p332 = por %p330, %p331
      %p333 = scmp.ne.s32.totalorder %s325, %s328
      %p334 = scmp.eq.s32.totalorder %s32, 0
      %p335 = por %p333, %p334
      %p336 = scmp.ne.s32.totalorder %s325, %s328
      %p337 = scmp.eq.s32.totalorder %s37, 1
      %p338 = por %p336, %p337
      %p339 = scmp.ne.s32.totalorder %s328, %s329
      %p340 = scmp.eq.s32.totalorder %s37, 0
      %p341 = por %p339, %p340
      %p342 = scmp.ne.s32.totalorder %s328, %s329
      %p343 = scmp.eq.s32.totalorder %s38, 1
      %p344 = por %p342, %p343
      %p346 = scmp.ne.s32.totalorder %s329, %s345
      %p347 = scmp.eq.s32.totalorder %s38, 0
      %p348 = por %p346, %p347
      %p349 = scmp.le.s32.totalorder 1, %s32
      %p350 = scmp.lt.s32.totalorder %s32, 3
      %p351 = pnand %p349, %p350
      %p352 = pneg %p351
      // Predicated region
      $region9: #{tpu_custom_call.1} parent=5 // pred_check
        _
      $region10: #{tpu_custom_call.1} parent=5 // pred_check_branch
        %354 = sbr.rel (%p351) target = $region12
      $region11: #{tpu_custom_call.1} parent=5 // pred_region
        %s355 = ssub.s32 %s32, 1
        // Predicated region
        $region13: #{tpu_custom_call.1} parent=11 // pred_check
          %p356 = pneg %p105
        $region14: #{tpu_custom_call.1} parent=11 // pred_check_branch
          %358 = sbr.rel (%p356) target = $region16
        $region15: #{tpu_custom_call.1} parent=11 // pred_region
          %s360 = ssub.s32 512, 512
          %361 = vsyncadd [#allocation6], %s360
          %s362 = sshll.u32 [#allocation7], 4
          %s363 = int_to_ptr.vmem [resolvable:$true] %s362
          %368 = dma.hbm_to_vmem [thread:$0]  %s2, 512, %s363, [#allocation6], 128, 128, 8
        $region16: #{tpu_custom_call.1} parent=11 // pred_fallthru
          _
        // Predicated region
        $region17: #{tpu_custom_call.1} parent=11 // pred_check
          %p369 = pneg %p126
        $region18: #{tpu_custom_call.1} parent=11 // pred_check_branch
          %371 = sbr.rel (%p369) target = $region20
        $region19: #{tpu_custom_call.1} parent=11 // pred_region
          _
        $region20: #{tpu_custom_call.1} parent=11 // pred_fallthru
          _
        // Predicated region
        $region21: #{tpu_custom_call.1} parent=11 // pred_check
          %p372 = pneg %p147
        $region22: #{tpu_custom_call.1} parent=11 // pred_check_branch
          %374 = sbr.rel (%p372) target = $region24
        $region23: #{tpu_custom_call.1} parent=11 // pred_region
          %s376 = ssub.s32 512, 512
          %377 = vsyncadd [#allocation9], %s376
          %s378 = sshll.u32 [#allocation8], 4
          %s379 = int_to_ptr.vmem [resolvable:$true] %s378
          %384 = dma.hbm_to_vmem [thread:$0]  %s4, 512, %s379, [#allocation9], 128, 128, 8
        $region24: #{tpu_custom_call.1} parent=11 // pred_fallthru
          _
        // Predicated region
        $region25: #{tpu_custom_call.1} parent=11 // pred_check
          %p385 = pneg %p168
        $region26: #{tpu_custom_call.1} parent=11 // pred_check_branch
          %387 = sbr.rel (%p385) target = $region28
        $region27: #{tpu_custom_call.1} parent=11 // pred_region
          %s389 = ssub.s32 16, 16
          %390 = vsyncadd [#allocation9], %s389
          %s392 = sshll.u32 [#allocation10], 4
          %s393 = int_to_ptr.vmem [resolvable:$true] %s392
          %395 = dma.hbm_to_vmem [thread:$0]  %s5, 16, %s393, [#allocation9]
        $region28: #{tpu_custom_call.1} parent=11 // pred_fallthru
          _
        // Predicated region
        $region29: #{tpu_custom_call.1} parent=11 // pred_check
          %p396 = pneg %p189
        $region30: #{tpu_custom_call.1} parent=11 // pred_check_branch
          %398 = sbr.rel (%p396) target = $region32
        $region31: #{tpu_custom_call.1} parent=11 // pred_region
          %s400 = ssub.s32 512, 512
          %401 = vsyncadd [#allocation12], %s400
          %s402 = sshll.u32 [#allocation11], 4
          %s403 = int_to_ptr.vmem [resolvable:$true] %s402
          %408 = dma.hbm_to_vmem [thread:$0]  %s6, 512, %s403, [#allocation12], 128, 128, 8
        $region32: #{tpu_custom_call.1} parent=11 // pred_fallthru
          _
        // Predicated region
        $region33: #{tpu_custom_call.1} parent=11 // pred_check
          %p409 = pneg %p210
        $region34: #{tpu_custom_call.1} parent=11 // pred_check_branch
          %411 = sbr.rel (%p409) target = $region36
        $region35: #{tpu_custom_call.1} parent=11 // pred_region
          %s413 = ssub.s32 16, 16
          %414 = vsyncadd [#allocation12], %s413
          %s416 = sshll.u32 [#allocation13], 4
          %s417 = int_to_ptr.vmem [resolvable:$true] %s416
          %419 = dma.hbm_to_vmem [thread:$0]  %s7, 16, %s417, [#allocation12]
        $region36: #{tpu_custom_call.1} parent=11 // pred_fallthru
          _
        // Predicated region
        $region37: #{tpu_custom_call.1} parent=11 // pred_check
          %p420 = pneg %p231
        $region38: #{tpu_custom_call.1} parent=11 // pred_check_branch
          %422 = sbr.rel (%p420) target = $region40
        $region39: #{tpu_custom_call.1} parent=11 // pred_region
          %s424 = ssub.s32 16, 16
          %425 = vsyncadd [#allocation15], %s424
          %s427 = sshll.u32 [#allocation14], 4
          %s428 = int_to_ptr.vmem [resolvable:$true] %s427
          %430 = dma.hbm_to_vmem [thread:$0]  %s8, 16, %s428, [#allocation15]
        $region40: #{tpu_custom_call.1} parent=11 // pred_fallthru
          _
        // Predicated region
        $region41: #{tpu_custom_call.1} parent=11 // pred_check
          %p431 = pneg %p252
        $region42: #{tpu_custom_call.1} parent=11 // pred_check_branch
          %433 = sbr.rel (%p431) target = $region44
        $region43: #{tpu_custom_call.1} parent=11 // pred_region
          %s435 = ssub.s32 16, 16
          %436 = vsyncadd [#allocation15], %s435
          %s438 = sshll.u32 [#allocation16], 4
          %s439 = int_to_ptr.vmem [resolvable:$true] %s438
          %441 = dma.hbm_to_vmem [thread:$0]  %s9, 16, %s439, [#allocation15]
        $region44: #{tpu_custom_call.1} parent=11 // pred_fallthru
          _
        // Predicated region
        $region45: #{tpu_custom_call.1} parent=11 // pred_check
          %p442 = pneg %p273
        $region46: #{tpu_custom_call.1} parent=11 // pred_check_branch
          %444 = sbr.rel (%p442) target = $region48
        $region47: #{tpu_custom_call.1} parent=11 // pred_region
          _
        $region48: #{tpu_custom_call.1} parent=11 // pred_fallthru
          _
        // Predicated region
        $region49: #{tpu_custom_call.1} parent=11 // pred_check
          %p445 = pneg %p294
        $region50: #{tpu_custom_call.1} parent=11 // pred_check_branch
          %447 = sbr.rel (%p445) target = $region52
        $region51: #{tpu_custom_call.1} parent=11 // pred_region
          %s449 = ssub.s32 512, 512
          %450 = vsyncadd [#allocation18], %s449
          %s451 = sshll.u32 [#allocation17], 4
          %s452 = int_to_ptr.vmem [resolvable:$true] %s451
          %457 = dma.hbm_to_vmem [thread:$0]  %s11, 512, %s452, [#allocation18], 128, 128, 8
        $region52: #{tpu_custom_call.1} parent=11 // pred_fallthru
          _
        // Predicated region
        $region53: #{tpu_custom_call.1} parent=11 // pred_check
          %p458 = pneg %p315
        $region54: #{tpu_custom_call.1} parent=11 // pred_check_branch
          %460 = sbr.rel (%p458) target = $region56
        $region55: #{tpu_custom_call.1} parent=11 // pred_region
          _
        $region56: #{tpu_custom_call.1} parent=11 // pred_fallthru
          _
      $region12: #{tpu_custom_call.1} parent=5 // pred_fallthru
        _
      %p461 = scmp.lt.s32.totalorder %s32, 2
      // Predicated region
      $region57: #{tpu_custom_call.1} parent=5 // pred_check
        %p462 = pneg %p461
      $region58: #{tpu_custom_call.1} parent=5 // pred_check_branch
        %464 = sbr.rel (%p462) target = $region60
      $region59: #{tpu_custom_call.1} parent=5 // pred_region
        // Predicated region
        $region61: #{tpu_custom_call.1} parent=59 // pred_check
          %p465 = pneg %p52
        $region62: #{tpu_custom_call.1} parent=59 // pred_check_branch
          %467 = sbr.rel (%p465) target = $region64
        $region63: #{tpu_custom_call.1} parent=59 // pred_region
          %s468 = sand.u32 %s42, 1
          %s469 = scalar_lea.sflag [#allocation3], %s468
          %s470 = sand.u32 %s42, 1
          %s471 = smul.addr %s470, 8
          %s472 = scalar_lea.vmem [#allocation2], %s471
          %s474 = ssub.s32 128, 128
          %475 = vsyncadd %s469, %s474
          %s476 = smul.addr %s32, 128
          %s477 = scalar_lea.hbm %s0, %s476
          %s479 = sshll.u32 %s472, 4
          %s480 = int_to_ptr.vmem [resolvable:$true] %s479
          %482 = dma.hbm_to_vmem [thread:$0]  %s477, 128, %s480, %s469
        $region64: #{tpu_custom_call.1} parent=59 // pred_fallthru
          _
        // Predicated region
        $region65: #{tpu_custom_call.1} parent=59 // pred_check
          %p483 = pneg %p78
        $region66: #{tpu_custom_call.1} parent=59 // pred_check_branch
          %485 = sbr.rel (%p483) target = $region68
        $region67: #{tpu_custom_call.1} parent=59 // pred_region
          %s486 = sand.u32 %s32, 1
          %s487 = scalar_lea.sflag [#allocation6], %s486
          %s488 = sand.u32 %s68, 1
          %s489 = smul.addr %s488, 8
          %s490 = scalar_lea.vmem [#allocation5], %s489
          %s492 = ssub.s32 128, 128
          %493 = vsyncadd %s487, %s492
          %s494 = smul.addr %s32, 128
          %s495 = scalar_lea.hbm %s1, %s494
          %s497 = sshll.u32 %s490, 4
          %s498 = int_to_ptr.vmem [resolvable:$true] %s497
          %500 = dma.hbm_to_vmem [thread:$0]  %s495, 128, %s498, %s487
        $region68: #{tpu_custom_call.1} parent=59 // pred_fallthru
          _
      $region60: #{tpu_custom_call.1} parent=5 // pred_fallthru
        _
      %p501 = scmp.le.s32.totalorder 1, %s32
      %p502 = scmp.lt.s32.totalorder %s32, 3
      %p503 = pnand %p501, %p502
      %p504 = pneg %p503
      // Predicated region
      $region69: #{tpu_custom_call.1} parent=5 // pred_check
        _
      $region70: #{tpu_custom_call.1} parent=5 // pred_check_branch
        %506 = sbr.rel (%p503) target = $region72
      $region71: #{tpu_custom_call.1} parent=5 // pred_region
        %s507 = ssub.s32 %s32, 1
        %s508 = sand.u32 %s45, 1
        %s509 = scalar_lea.sflag [#allocation3], %s508
        %s510 = sand.u32 %s45, 1
        %s511 = smul.addr %s510, 8
        %s512 = scalar_lea.vmem [#allocation2], %s511
        // Predicated region
        $region73: #{tpu_custom_call.1} parent=71 // pred_check
          %p513 = pneg %p58
        $region74: #{tpu_custom_call.1} parent=71 // pred_check_branch
          %515 = sbr.rel (%p513) target = $region76
        $region75: #{tpu_custom_call.1} parent=71 // pred_region
          %516 = dma.done %s509, 128
        $region76: #{tpu_custom_call.1} parent=71 // pred_fallthru
          _
        %s517 = sand.u32 %s37, 1
        %s518 = scalar_lea.sflag [#allocation6], %s517
        %s519 = sand.u32 %s71, 1
        %s520 = smul.addr %s519, 8
        %s521 = scalar_lea.vmem [#allocation5], %s520
        // Predicated region
        $region77: #{tpu_custom_call.1} parent=71 // pred_check
          %p522 = pneg %p84
        $region78: #{tpu_custom_call.1} parent=71 // pred_check_branch
          %524 = sbr.rel (%p522) target = $region80
        $region79: #{tpu_custom_call.1} parent=71 // pred_region
          %525 = dma.done %s518, 128
        $region80: #{tpu_custom_call.1} parent=71 // pred_fallthru
          _
        // Predicated region
        $region81: #{tpu_custom_call.1} parent=71 // pred_check
          %p526 = pneg %p105
        $region82: #{tpu_custom_call.1} parent=71 // pred_check_branch
          %528 = sbr.rel (%p526) target = $region84
        $region83: #{tpu_custom_call.1} parent=71 // pred_region
          %529 = dma.done [#allocation6], 512
        $region84: #{tpu_custom_call.1} parent=71 // pred_fallthru
          _
        // Predicated region
        $region85: #{tpu_custom_call.1} parent=71 // pred_check
          %p530 = pneg %p147
        $region86: #{tpu_custom_call.1} parent=71 // pred_check_branch
          %532 = sbr.rel (%p530) target = $region88
        $region87: #{tpu_custom_call.1} parent=71 // pred_region
          %533 = dma.done [#allocation9], 512
        $region88: #{tpu_custom_call.1} parent=71 // pred_fallthru
          _
        // Predicated region
        $region89: #{tpu_custom_call.1} parent=71 // pred_check
          %p534 = pneg %p168
        $region90: #{tpu_custom_call.1} parent=71 // pred_check_branch
          %536 = sbr.rel (%p534) target = $region92
        $region91: #{tpu_custom_call.1} parent=71 // pred_region
          %537 = dma.done [#allocation9], 16
        $region92: #{tpu_custom_call.1} parent=71 // pred_fallthru
          _
        // Predicated region
        $region93: #{tpu_custom_call.1} parent=71 // pred_check
          %p538 = pneg %p189
        $region94: #{tpu_custom_call.1} parent=71 // pred_check_branch
          %540 = sbr.rel (%p538) target = $region96
        $region95: #{tpu_custom_call.1} parent=71 // pred_region
          %541 = dma.done [#allocation12], 512
        $region96: #{tpu_custom_call.1} parent=71 // pred_fallthru
          _
        // Predicated region
        $region97: #{tpu_custom_call.1} parent=71 // pred_check
          %p542 = pneg %p210
        $region98: #{tpu_custom_call.1} parent=71 // pred_check_branch
          %544 = sbr.rel (%p542) target = $region100
        $region99: #{tpu_custom_call.1} parent=71 // pred_region
          %545 = dma.done [#allocation12], 16
        $region100: #{tpu_custom_call.1} parent=71 // pred_fallthru
          _
        // Predicated region
        $region101: #{tpu_custom_call.1} parent=71 // pred_check
          %p546 = pneg %p231
        $region102: #{tpu_custom_call.1} parent=71 // pred_check_branch
          %548 = sbr.rel (%p546) target = $region104
        $region103: #{tpu_custom_call.1} parent=71 // pred_region
          %549 = dma.done [#allocation15], 16
        $region104: #{tpu_custom_call.1} parent=71 // pred_fallthru
          _
        // Predicated region
        $region105: #{tpu_custom_call.1} parent=71 // pred_check
          %p550 = pneg %p252
        $region106: #{tpu_custom_call.1} parent=71 // pred_check_branch
          %552 = sbr.rel (%p550) target = $region108
        $region107: #{tpu_custom_call.1} parent=71 // pred_region
          %553 = dma.done [#allocation15], 16
        $region108: #{tpu_custom_call.1} parent=71 // pred_fallthru
          _
        // Predicated region
        $region109: #{tpu_custom_call.1} parent=71 // pred_check
          %p554 = pneg %p294
        $region110: #{tpu_custom_call.1} parent=71 // pred_check_branch
          %556 = sbr.rel (%p554) target = $region112
        $region111: #{tpu_custom_call.1} parent=71 // pred_region
          %557 = dma.done [#allocation18], 512
        $region112: #{tpu_custom_call.1} parent=71 // pred_fallthru
          _
        %s558 = sand.u32 %s45, 1
        %s559 = scalar_lea.sflag [#allocation3], %s558
        %s560 = sand.u32 %s45, 1
        %s561 = smul.addr %s560, 8
        %s562 = scalar_lea.vmem [#allocation2], %s561
        %p563 = pneg %p58
        %p564 = pneg %p55
        %s565 = sand.u32 %s37, 1
        %s566 = scalar_lea.sflag [#allocation6], %s565
        %s567 = sand.u32 %s71, 1
        %s568 = smul.addr %s567, 8
        %s569 = scalar_lea.vmem [#allocation5], %s568
        %p570 = pneg %p84
        %p571 = pneg %p81
        %p572 = pneg %p105
        %p573 = pneg %p102
        %p574 = pneg %p126
        %p575 = pneg %p123
        %p576 = pneg %p147
        %p577 = pneg %p144
        %p578 = pneg %p168
        %p579 = pneg %p165
        %p580 = pneg %p189
        %p581 = pneg %p186
        %p582 = pneg %p210
        %p583 = pneg %p207
        %p584 = pneg %p231
        %p585 = pneg %p228
        %p586 = pneg %p252
        %p587 = pneg %p249
        %p588 = pneg %p273
        %p589 = pneg %p270
        %p590 = pneg %p294
        %p591 = pneg %p291
        %p592 = pneg %p315
        %p593 = pneg %p312
        %p594 = pneg %p341
        %p595 = pneg %p338
        %s596 = sand.u32 %s328, 1
        %s597 = scalar_lea.sflag [#allocation4], %s596
        %s598 = sand.u32 %s328, 1
        %s599 = smul.addr %s598, 8
        %s600 = scalar_lea.vmem [#allocation19], %s599
        %v601 = vld [vmem:[%s512] sm:$0xff]
        %v602 = vld [vmem:[#allocation7] sm:$0xff]
        %v603 = vld [vmem:[#allocation7 + $0x8] sm:$0xff]
        %v604 = vld [vmem:[#allocation7 + $0x10] sm:$0xff]
        %v605 = vld [vmem:[#allocation7 + $0x18] sm:$0xff]
        %v606 = vld [vmem:[%s3] sm:$0x1]
        %v608 = vlaneseq
        %v609 = vshrl.u32 %v608, 7
        %v610 = vsub.s32 0, %v609
        %v611 = vrot.slane %v606, %v610
        %vm613 = vcmask 261120
        %v615 = vsel %vm613, %v601, 0
        %617 = vmatprep.subr.mxu0 0.0
        %618 = vmatpush1.msra.mxu0 %v602
        %619 = vmatprep.subr.mxu0 0.0
        %620 = vmatpush1.msra.mxu0 %v603
        %621 = vmatprep.subr.mxu0 0.0
        %622 = vmatpush1.msra.mxu0 %v604
        %623 = vmatprep.subr.mxu0 0.0
        %624 = vmatpush1.msra.mxu0 %v605
        %625 = vmatprep.subr.mxu0 0.0
        %626 = vmatpush1.msra.mxu0 0.0
        %627 = vmatprep.subr.mxu0 0.0
        %628 = vmatpush1.msra.mxu0 0.0
        %629 = vmatprep.subr.mxu0 0.0
        %630 = vmatpush1.msra.mxu0 0.0
        %631 = vmatprep.subr.mxu0 0.0
        %632 = vmatpush1.msra.mxu0 0.0
        %633 = vmatprep.subr.mxu0 0.0
        %634 = vmatpush1.msra.mxu0 0.0
        %635 = vmatprep.subr.mxu0 0.0
        %636 = vmatpush1.msra.mxu0 0.0
        %637 = vmatprep.subr.mxu0 0.0
        %638 = vmatpush1.msra.mxu0 0.0
        %639 = vmatprep.subr.mxu0 0.0
        %640 = vmatpush1.msra.mxu0 0.0
        %641 = vmatprep.subr.mxu0 0.0
        %642 = vmatpush1.msra.mxu0 0.0
        %643 = vmatprep.subr.mxu0 0.0
        %644 = vmatpush1.msra.mxu0 0.0
        %645 = vmatprep.subr.mxu0 0.0
        %646 = vmatpush1.msra.mxu0 0.0
        %647 = vmatprep.subr.mxu0 0.0
        %648 = vmatpush1.msra.mxu0 0.0
        %649 = vmatprep.subr.mxu0 0.0
        %650 = vmatpush1.msra.mxu0 0.0
        %651 = vmatprep.subr.mxu0 0.0
        %652 = vmatpush1.msra.mxu0 0.0
        %653 = vmatprep.subr.mxu0 0.0
        %654 = vmatpush1.msra.mxu0 0.0
        %655 = vmatprep.subr.mxu0 0.0
        %656 = vmatpush1.msra.mxu0 0.0
        %657 = vmatprep.subr.mxu0 0.0
        %658 = vmatpush1.msra.mxu0 0.0
        %659 = vmatprep.subr.mxu0 0.0
        %660 = vmatpush1.msra.mxu0 0.0
        %661 = vmatprep.subr.mxu0 0.0
        %662 = vmatpush1.msra.mxu0 0.0
        %663 = vmatprep.subr.mxu0 0.0
        %664 = vmatpush1.msra.mxu0 0.0
        %665 = vmatprep.subr.mxu0 0.0
        %666 = vmatpush1.msra.mxu0 0.0
        %667 = vmatprep.subr.mxu0 0.0
        %668 = vmatpush1.msra.mxu0 0.0
        %669 = vmatprep.subr.mxu0 0.0
        %670 = vmatpush1.msra.mxu0 0.0
        %671 = vmatprep.subr.mxu0 0.0
        %672 = vmatpush1.msra.mxu0 0.0
        %673 = vmatprep.subr.mxu0 0.0
        %674 = vmatpush1.msra.mxu0 0.0
        %675 = vmatprep.subr.mxu0 0.0
        %676 = vmatpush1.msra.mxu0 0.0
        %677 = vmatprep.subr.mxu0 0.0
        %678 = vmatpush1.msra.mxu0 0.0
        %679 = vmatprep.subr.mxu0 0.0
        %680 = vmatpush1.msra.mxu0 0.0
        %681 = vmatprep.mubr.f32.mxu0 0.0
        %682 = vmatmul.mubr.f32.gmra.mrb[0].mxu0 %v615
        %v683 = vpop.f32.mrb[0].mxu0
        %v684 = vadd.f32 %v611, %v683
        %v685 = vpop.f32.mrb[0].mxu0
        %686 = vdwg.mxu0
        %v687 = vld [vmem:[%s521] sm:$0xff]
        %v688 = vld [vmem:[#allocation8] sm:$0xff]
        %v689 = vld [vmem:[#allocation8 + $0x8] sm:$0xff]
        %v690 = vld [vmem:[#allocation8 + $0x10] sm:$0xff]
        %v691 = vld [vmem:[#allocation8 + $0x18] sm:$0xff]
        %v692 = vld [vmem:[#allocation10] sm:$0x1]
        %v694 = vlaneseq
        %v695 = vshrl.u32 %v694, 7
        %v696 = vsub.s32 0, %v695
        %v697 = vrot.slane %v692, %v696
        %v700 = vsel %vm613, %v687, 0
        %702 = vmatprep.subr.mxu0 0.0
        %703 = vmatpush1.msra.mxu0 %v688
        %704 = vmatprep.subr.mxu0 0.0
        %705 = vmatpush1.msra.mxu0 %v689
        %706 = vmatprep.subr.mxu0 0.0
        %707 = vmatpush1.msra.mxu0 %v690
        %708 = vmatprep.subr.mxu0 0.0
        %709 = vmatpush1.msra.mxu0 %v691
        %710 = vmatprep.subr.mxu0 0.0
        %711 = vmatpush1.msra.mxu0 0.0
        %712 = vmatprep.subr.mxu0 0.0
        %713 = vmatpush1.msra.mxu0 0.0
        %714 = vmatprep.subr.mxu0 0.0
        %715 = vmatpush1.msra.mxu0 0.0
        %716 = vmatprep.subr.mxu0 0.0
        %717 = vmatpush1.msra.mxu0 0.0
        %718 = vmatprep.subr.mxu0 0.0
        %719 = vmatpush1.msra.mxu0 0.0
        %720 = vmatprep.subr.mxu0 0.0
        %721 = vmatpush1.msra.mxu0 0.0
        %722 = vmatprep.subr.mxu0 0.0
        %723 = vmatpush1.msra.mxu0 0.0
        %724 = vmatprep.subr.mxu0 0.0
        %725 = vmatpush1.msra.mxu0 0.0
        %726 = vmatprep.subr.mxu0 0.0
        %727 = vmatpush1.msra.mxu0 0.0
        %728 = vmatprep.subr.mxu0 0.0
        %729 = vmatpush1.msra.mxu0 0.0
        %730 = vmatprep.subr.mxu0 0.0
        %731 = vmatpush1.msra.mxu0 0.0
        %732 = vmatprep.subr.mxu0 0.0
        %733 = vmatpush1.msra.mxu0 0.0
        %734 = vmatprep.subr.mxu0 0.0
        %735 = vmatpush1.msra.mxu0 0.0
        %736 = vmatprep.subr.mxu0 0.0
        %737 = vmatpush1.msra.mxu0 0.0
        %738 = vmatprep.subr.mxu0 0.0
        %739 = vmatpush1.msra.mxu0 0.0
        %740 = vmatprep.subr.mxu0 0.0
        %741 = vmatpush1.msra.mxu0 0.0
        %742 = vmatprep.subr.mxu0 0.0
        %743 = vmatpush1.msra.mxu0 0.0
        %744 = vmatprep.subr.mxu0 0.0
        %745 = vmatpush1.msra.mxu0 0.0
        %746 = vmatprep.subr.mxu0 0.0
        %747 = vmatpush1.msra.mxu0 0.0
        %748 = vmatprep.subr.mxu0 0.0
        %749 = vmatpush1.msra.mxu0 0.0
        %750 = vmatprep.subr.mxu0 0.0
        %751 = vmatpush1.msra.mxu0 0.0
        %752 = vmatprep.subr.mxu0 0.0
        %753 = vmatpush1.msra.mxu0 0.0
        %754 = vmatprep.subr.mxu0 0.0
        %755 = vmatpush1.msra.mxu0 0.0
        %756 = vmatprep.subr.mxu0 0.0
        %757 = vmatpush1.msra.mxu0 0.0
        %758 = vmatprep.subr.mxu0 0.0
        %759 = vmatpush1.msra.mxu0 0.0
        %760 = vmatprep.subr.mxu0 0.0
        %761 = vmatpush1.msra.mxu0 0.0
        %762 = vmatprep.subr.mxu0 0.0
        %763 = vmatpush1.msra.mxu0 0.0
        %764 = vmatprep.subr.mxu0 0.0
        %765 = vmatpush1.msra.mxu0 0.0
        %766 = vmatprep.mubr.f32.mxu0 0.0
        %767 = vmatmul.mubr.f32.gmra.mrb[0].mxu0 %v700
        %v768 = vpop.f32.mrb[0].mxu0
        %v769 = vadd.f32 %v697, %v768
        %v770 = vpop.f32.mrb[0].mxu0
        %771 = vdwg.mxu0
        %v772 = vld [vmem:[%s10] sm:$0xff]
        %v773 = vld [vmem:[%s10 + $0x8] sm:$0xff]
        %v774 = vld [vmem:[%s10 + $0x10] sm:$0xff]
        %v775 = vld [vmem:[%s10 + $0x18] sm:$0xff]
        %v776 = vmul.f32 %v769, %v772
        %v777 = vmul.f32 %v769, %v773
        %v778 = vmul.f32 %v769, %v774
        %v779 = vmul.f32 %v769, %v775
        %v781 = vsel %vm613, %v684, 0
        %v784 = vsel %vm613, %v776, 0
        %v787 = vsel %vm613, %v777, 0
        %v790 = vsel %vm613, %v778, 0
        %v793 = vsel %vm613, %v779, 0
        %795 = vmatprep.subr.mxu0 0.0
        %796 = vmatpush1.xpose.msra.mxu0 %v784
        %797 = vmatprep.subr.mxu0 0.0
        %798 = vmatpush1.xpose.msra.mxu0 %v787
        %799 = vmatprep.subr.mxu0 0.0
        %800 = vmatpush1.xpose.msra.mxu0 %v790
        %801 = vmatprep.subr.mxu0 0.0
        %802 = vmatpush1.xpose.msra.mxu0 %v793
        %803 = vmatprep.subr.mxu0 0.0
        %804 = vmatpush1.xpose.msra.mxu0 0.0
        %805 = vmatprep.subr.mxu0 0.0
        %806 = vmatpush1.xpose.msra.mxu0 0.0
        %807 = vmatprep.subr.mxu0 0.0
        %808 = vmatpush1.xpose.msra.mxu0 0.0
        %809 = vmatprep.subr.mxu0 0.0
        %810 = vmatpush1.xpose.msra.mxu0 0.0
        %811 = vmatprep.subr.mxu0 0.0
        %812 = vmatpush1.xpose.msra.mxu0 0.0
        %813 = vmatprep.subr.mxu0 0.0
        %814 = vmatpush1.xpose.msra.mxu0 0.0
        %815 = vmatprep.subr.mxu0 0.0
        %816 = vmatpush1.xpose.msra.mxu0 0.0
        %817 = vmatprep.subr.mxu0 0.0
        %818 = vmatpush1.xpose.msra.mxu0 0.0
        %819 = vmatprep.subr.mxu0 0.0
        %820 = vmatpush1.xpose.msra.mxu0 0.0
        %821 = vmatprep.subr.mxu0 0.0
        %822 = vmatpush1.xpose.msra.mxu0 0.0
        %823 = vmatprep.subr.mxu0 0.0
        %824 = vmatpush1.xpose.msra.mxu0 0.0
        %825 = vmatprep.subr.mxu0 0.0
        %826 = vmatpush1.xpose.msra.mxu0 0.0
        %827 = vmatprep.subr.mxu0 0.0
        %828 = vmatpush1.xpose.msra.mxu0 0.0
        %829 = vmatprep.subr.mxu0 0.0
        %830 = vmatpush1.xpose.msra.mxu0 0.0
        %831 = vmatprep.subr.mxu0 0.0
        %832 = vmatpush1.xpose.msra.mxu0 0.0
        %833 = vmatprep.subr.mxu0 0.0
        %834 = vmatpush1.xpose.msra.mxu0 0.0
        %835 = vmatprep.subr.mxu0 0.0
        %836 = vmatpush1.xpose.msra.mxu0 0.0
        %837 = vmatprep.subr.mxu0 0.0
        %838 = vmatpush1.xpose.msra.mxu0 0.0
        %839 = vmatprep.subr.mxu0 0.0
        %840 = vmatpush1.xpose.msra.mxu0 0.0
        %841 = vmatprep.subr.mxu0 0.0
        %842 = vmatpush1.xpose.msra.mxu0 0.0
        %843 = vmatprep.subr.mxu0 0.0
        %844 = vmatpush1.xpose.msra.mxu0 0.0
        %845 = vmatprep.subr.mxu0 0.0
        %846 = vmatpush1.xpose.msra.mxu0 0.0
        %847 = vmatprep.subr.mxu0 0.0
        %848 = vmatpush1.xpose.msra.mxu0 0.0
        %849 = vmatprep.subr.mxu0 0.0
        %850 = vmatpush1.xpose.msra.mxu0 0.0
        %851 = vmatprep.subr.mxu0 0.0
        %852 = vmatpush1.xpose.msra.mxu0 0.0
        %853 = vmatprep.subr.mxu0 0.0
        %854 = vmatpush1.xpose.msra.mxu0 0.0
        %855 = vmatprep.subr.mxu0 0.0
        %856 = vmatpush1.xpose.msra.mxu0 0.0
        %857 = vmatprep.subr.mxu0 0.0
        %858 = vmatpush1.xpose.msra.mxu0 0.0
        %859 = vmatprep.mubr.f32.mxu0 0.0
        %860 = vmatmul.mubr.f32.gmra.mrb[0].mxu0 %v781
        %v861 = vpop.f32.mrb[0].mxu0
        %v862 = vadd.f32 0.0, %v861
        %v863 = vpop.f32.mrb[0].mxu0
        %864 = vdwg.mxu0
        %v865 = vmul.f32 %v862, 0.35355338
        %v866 = vld [vmem:[%s12] sm:$0xff]
        %v867 = vadd.f32 %v865, %v866
        %v868 = vsel %vm613, %v867, -inf
        %869 = vmax.xlane.f32.xlu0 %v868
        %v870 = vpop.xlane.xlu0 %869
        %v871 = vsub.f32 %v867, %v870
        %v872 = vmul.f32 %v871, 1.442695
        %v873 = vpow.pop %v872
        %v874 = vld [vmem:[#allocation17] sm:$0xff]
        %v875 = vld [vmem:[#allocation17 + $0x8] sm:$0xff]
        %v876 = vld [vmem:[#allocation17 + $0x10] sm:$0xff]
        %v877 = vld [vmem:[#allocation17 + $0x18] sm:$0xff]
        %v879 = vsel %vm613, %v873, 0
        %881 = vmatprep.subr.mxu0 0.0
        %882 = vmatpush1.msra.mxu0 %v874
        %883 = vmatprep.subr.mxu0 0.0
        %884 = vmatpush1.msra.mxu0 %v875
        %885 = vmatprep.subr.mxu0 0.0
        %886 = vmatpush1.msra.mxu0 %v876
        %887 = vmatprep.subr.mxu0 0.0
        %888 = vmatpush1.msra.mxu0 %v877
        %889 = vmatprep.subr.mxu0 0.0
        %890 = vmatpush1.msra.mxu0 0.0
        %891 = vmatprep.subr.mxu0 0.0
        %892 = vmatpush1.msra.mxu0 0.0
        %893 = vmatprep.subr.mxu0 0.0
        %894 = vmatpush1.msra.mxu0 0.0
        %895 = vmatprep.subr.mxu0 0.0
        %896 = vmatpush1.msra.mxu0 0.0
        %897 = vmatprep.subr.mxu0 0.0
        %898 = vmatpush1.msra.mxu0 0.0
        %899 = vmatprep.subr.mxu0 0.0
        %900 = vmatpush1.msra.mxu0 0.0
        %901 = vmatprep.subr.mxu0 0.0
        %902 = vmatpush1.msra.mxu0 0.0
        %903 = vmatprep.subr.mxu0 0.0
        %904 = vmatpush1.msra.mxu0 0.0
        %905 = vmatprep.subr.mxu0 0.0
        %906 = vmatpush1.msra.mxu0 0.0
        %907 = vmatprep.subr.mxu0 0.0
        %908 = vmatpush1.msra.mxu0 0.0
        %909 = vmatprep.subr.mxu0 0.0
        %910 = vmatpush1.msra.mxu0 0.0
        %911 = vmatprep.subr.mxu0 0.0
        %912 = vmatpush1.msra.mxu0 0.0
        %913 = vmatprep.subr.mxu0 0.0
        %914 = vmatpush1.msra.mxu0 0.0
        %915 = vmatprep.subr.mxu0 0.0
        %916 = vmatpush1.msra.mxu0 0.0
        %917 = vmatprep.subr.mxu0 0.0
        %918 = vmatpush1.msra.mxu0 0.0
        %919 = vmatprep.subr.mxu0 0.0
        %920 = vmatpush1.msra.mxu0 0.0
        %921 = vmatprep.subr.mxu0 0.0
        %922 = vmatpush1.msra.mxu0 0.0
        %923 = vmatprep.subr.mxu0 0.0
        %924 = vmatpush1.msra.mxu0 0.0
        %925 = vmatprep.subr.mxu0 0.0
        %926 = vmatpush1.msra.mxu0 0.0
        %927 = vmatprep.subr.mxu0 0.0
        %928 = vmatpush1.msra.mxu0 0.0
        %929 = vmatprep.subr.mxu0 0.0
        %930 = vmatpush1.msra.mxu0 0.0
        %931 = vmatprep.subr.mxu0 0.0
        %932 = vmatpush1.msra.mxu0 0.0
        %933 = vmatprep.subr.mxu0 0.0
        %934 = vmatpush1.msra.mxu0 0.0
        %935 = vmatprep.subr.mxu0 0.0
        %936 = vmatpush1.msra.mxu0 0.0
        %937 = vmatprep.subr.mxu0 0.0
        %938 = vmatpush1.msra.mxu0 0.0
        %939 = vmatprep.subr.mxu0 0.0
        %940 = vmatpush1.msra.mxu0 0.0
        %941 = vmatprep.subr.mxu0 0.0
        %942 = vmatpush1.msra.mxu0 0.0
        %943 = vmatprep.subr.mxu0 0.0
        %944 = vmatpush1.msra.mxu0 0.0
        %945 = vmatprep.mubr.f32.mxu0 0.0
        %946 = vmatmul.mubr.f32.gmra.mrb[0].mxu0 %v879
        %v947 = vpop.f32.mrb[0].mxu0
        %v948 = vadd.f32 0.0, %v947
        %v949 = vpop.f32.mrb[0].mxu0
        %950 = vdwg.mxu0
        %v951 = vmax.f32 %v948, 1e-30
        %v952 = vrcp.pop %v951
        %v953 = vmul.f32 %v951, %v952
        %v954 = vsub.f32 2.0, %v953
        %v955 = vmul.f32 %v952, %v954
        %v956 = vmul.f32 %v873, %v955
        %957 = vrot.lane.b32.xlu0 %v776, 96
        %v958 = vpop.permute.xlu0 %957
        %959 = vrot.lane.b32.xlu0 %v777, 96
        %v960 = vpop.permute.xlu0 %959
        %961 = vrot.lane.b32.xlu0 %v778, 96
        %v962 = vpop.permute.xlu0 %961
        %963 = vrot.lane.b32.xlu0 %v779, 96
        %v964 = vpop.permute.xlu0 %963
        %v970 = vsel %vm613, %v956, 0
        %972 = vmatprep.subr.mxu0 0.0
        %973 = vmatpush1.msra.mxu0 %v958
        %974 = vmatprep.subr.mxu0 0.0
        %975 = vmatpush1.msra.mxu0 %v960
        %976 = vmatprep.subr.mxu0 0.0
        %977 = vmatpush1.msra.mxu0 %v962
        %978 = vmatprep.subr.mxu0 0.0
        %979 = vmatpush1.msra.mxu0 %v964
        %980 = vmatprep.subr.mxu0 0.0
        %981 = vmatpush1.msra.mxu0 0.0
        %982 = vmatprep.subr.mxu0 0.0
        %983 = vmatpush1.msra.mxu0 0.0
        %984 = vmatprep.subr.mxu0 0.0
        %985 = vmatpush1.msra.mxu0 0.0
        %986 = vmatprep.subr.mxu0 0.0
        %987 = vmatpush1.msra.mxu0 0.0
        %988 = vmatprep.subr.mxu0 0.0
        %989 = vmatpush1.msra.mxu0 0.0
        %990 = vmatprep.subr.mxu0 0.0
        %991 = vmatpush1.msra.mxu0 0.0
        %992 = vmatprep.subr.mxu0 0.0
        %993 = vmatpush1.msra.mxu0 0.0
        %994 = vmatprep.subr.mxu0 0.0
        %995 = vmatpush1.msra.mxu0 0.0
        %996 = vmatprep.subr.mxu0 0.0
        %997 = vmatpush1.msra.mxu0 0.0
        %998 = vmatprep.subr.mxu0 0.0
        %999 = vmatpush1.msra.mxu0 0.0
        %1000 = vmatprep.subr.mxu0 0.0
        %1001 = vmatpush1.msra.mxu0 0.0
        %1002 = vmatprep.subr.mxu0 0.0
        %1003 = vmatpush1.msra.mxu0 0.0
        %1004 = vmatprep.subr.mxu0 0.0
        %1005 = vmatpush1.msra.mxu0 0.0
        %1006 = vmatprep.subr.mxu0 0.0
        %1007 = vmatpush1.msra.mxu0 0.0
        %1008 = vmatprep.subr.mxu0 0.0
        %1009 = vmatpush1.msra.mxu0 0.0
        %1010 = vmatprep.subr.mxu0 0.0
        %1011 = vmatpush1.msra.mxu0 0.0
        %1012 = vmatprep.subr.mxu0 0.0
        %1013 = vmatpush1.msra.mxu0 0.0
        %1014 = vmatprep.subr.mxu0 0.0
        %1015 = vmatpush1.msra.mxu0 0.0
        %1016 = vmatprep.subr.mxu0 0.0
        %1017 = vmatpush1.msra.mxu0 0.0
        %1018 = vmatprep.subr.mxu0 0.0
        %1019 = vmatpush1.msra.mxu0 0.0
        %1020 = vmatprep.subr.mxu0 0.0
        %1021 = vmatpush1.msra.mxu0 0.0
        %1022 = vmatprep.subr.mxu0 0.0
        %1023 = vmatpush1.msra.mxu0 0.0
        %1024 = vmatprep.subr.mxu0 0.0
        %1025 = vmatpush1.msra.mxu0 0.0
        %1026 = vmatprep.subr.mxu0 0.0
        %1027 = vmatpush1.msra.mxu0 0.0
        %1028 = vmatprep.subr.mxu0 0.0
        %1029 = vmatpush1.msra.mxu0 0.0
        %1030 = vmatprep.subr.mxu0 0.0
        %1031 = vmatpush1.msra.mxu0 0.0
        %1032 = vmatprep.subr.mxu0 0.0
        %1033 = vmatpush1.msra.mxu0 0.0
        %1034 = vmatprep.subr.mxu0 0.0
        %1035 = vmatpush1.msra.mxu0 0.0
        %1036 = vmatprep.mubr.f32.mxu0 0.0
        %1037 = vmatmul.mubr.f32.gmra.mrb[0].mxu0 %v970
        %v1038 = vpop.f32.mrb[0].mxu0
        %v1039 = vadd.f32 0.0, %v1038
        %v1040 = vpop.f32.mrb[0].mxu0
        %1041 = vdwg.mxu0
        %v1042 = vld [vmem:[#allocation11] sm:$0xff]
        %v1043 = vld [vmem:[#allocation11 + $0x8] sm:$0xff]
        %v1044 = vld [vmem:[#allocation11 + $0x10] sm:$0xff]
        %v1045 = vld [vmem:[#allocation11 + $0x18] sm:$0xff]
        %v1046 = vld [vmem:[#allocation13] sm:$0x1]
        %v1048 = vlaneseq
        %v1049 = vshrl.u32 %v1048, 7
        %v1050 = vsub.s32 0, %v1049
        %v1051 = vrot.slane %v1046, %v1050
        %v1054 = vsel %vm613, %v1039, 0
        %1056 = vmatprep.subr.mxu0 0.0
        %1057 = vmatpush1.msra.mxu0 %v1042
        %1058 = vmatprep.subr.mxu0 0.0
        %1059 = vmatpush1.msra.mxu0 %v1043
        %1060 = vmatprep.subr.mxu0 0.0
        %1061 = vmatpush1.msra.mxu0 %v1044
        %1062 = vmatprep.subr.mxu0 0.0
        %1063 = vmatpush1.msra.mxu0 %v1045
        %1064 = vmatprep.subr.mxu0 0.0
        %1065 = vmatpush1.msra.mxu0 0.0
        %1066 = vmatprep.subr.mxu0 0.0
        %1067 = vmatpush1.msra.mxu0 0.0
        %1068 = vmatprep.subr.mxu0 0.0
        %1069 = vmatpush1.msra.mxu0 0.0
        %1070 = vmatprep.subr.mxu0 0.0
        %1071 = vmatpush1.msra.mxu0 0.0
        %1072 = vmatprep.subr.mxu0 0.0
        %1073 = vmatpush1.msra.mxu0 0.0
        %1074 = vmatprep.subr.mxu0 0.0
        %1075 = vmatpush1.msra.mxu0 0.0
        %1076 = vmatprep.subr.mxu0 0.0
        %1077 = vmatpush1.msra.mxu0 0.0
        %1078 = vmatprep.subr.mxu0 0.0
        %1079 = vmatpush1.msra.mxu0 0.0
        %1080 = vmatprep.subr.mxu0 0.0
        %1081 = vmatpush1.msra.mxu0 0.0
        %1082 = vmatprep.subr.mxu0 0.0
        %1083 = vmatpush1.msra.mxu0 0.0
        %1084 = vmatprep.subr.mxu0 0.0
        %1085 = vmatpush1.msra.mxu0 0.0
        %1086 = vmatprep.subr.mxu0 0.0
        %1087 = vmatpush1.msra.mxu0 0.0
        %1088 = vmatprep.subr.mxu0 0.0
        %1089 = vmatpush1.msra.mxu0 0.0
        %1090 = vmatprep.subr.mxu0 0.0
        %1091 = vmatpush1.msra.mxu0 0.0
        %1092 = vmatprep.subr.mxu0 0.0
        %1093 = vmatpush1.msra.mxu0 0.0
        %1094 = vmatprep.subr.mxu0 0.0
        %1095 = vmatpush1.msra.mxu0 0.0
        %1096 = vmatprep.subr.mxu0 0.0
        %1097 = vmatpush1.msra.mxu0 0.0
        %1098 = vmatprep.subr.mxu0 0.0
        %1099 = vmatpush1.msra.mxu0 0.0
        %1100 = vmatprep.subr.mxu0 0.0
        %1101 = vmatpush1.msra.mxu0 0.0
        %1102 = vmatprep.subr.mxu0 0.0
        %1103 = vmatpush1.msra.mxu0 0.0
        %1104 = vmatprep.subr.mxu0 0.0
        %1105 = vmatpush1.msra.mxu0 0.0
        %1106 = vmatprep.subr.mxu0 0.0
        %1107 = vmatpush1.msra.mxu0 0.0
        %1108 = vmatprep.subr.mxu0 0.0
        %1109 = vmatpush1.msra.mxu0 0.0
        %1110 = vmatprep.subr.mxu0 0.0
        %1111 = vmatpush1.msra.mxu0 0.0
        %1112 = vmatprep.subr.mxu0 0.0
        %1113 = vmatpush1.msra.mxu0 0.0
        %1114 = vmatprep.subr.mxu0 0.0
        %1115 = vmatpush1.msra.mxu0 0.0
        %1116 = vmatprep.subr.mxu0 0.0
        %1117 = vmatpush1.msra.mxu0 0.0
        %1118 = vmatprep.subr.mxu0 0.0
        %1119 = vmatpush1.msra.mxu0 0.0
        %1120 = vmatprep.mubr.f32.mxu0 0.0
        %1121 = vmatmul.mubr.f32.gmra.mrb[0].mxu0 %v1054
        %v1122 = vpop.f32.mrb[0].mxu0
        %v1123 = vadd.f32 %v1051, %v1122
        %v1124 = vpop.f32.mrb[0].mxu0
        %1125 = vdwg.mxu0
        %v1126 = vld [vmem:[%s512] sm:$0xff]
        %v1127 = vadd.f32 %v1126, %v1123
        %v1128 = vsel %vm613, %v1127, 0.0
        %1129 = vadd.xlane.f32.xlu0 %v1128
        %v1130 = vpop.xlane.xlu0 %1129
        %v1131 = vrcp.pop 32.0
        %v1132 = vmul.f32 %v1130, %v1131
        %v1133 = vsub.f32 %v1127, %v1132
        %v1134 = vmul.f32 %v1133, %v1133
        %v1135 = vsel %vm613, %v1134, 0.0
        %1136 = vadd.xlane.f32.xlu0 %v1135
        %v1137 = vpop.xlane.xlu0 %1136
        %v1138 = vmul.f32 %v1137, %v1131
        %v1139 = vadd.f32 %v1138, 1e-05
        %v1140 = vrsqrt.pop %v1139
        %v1141 = vmul.f32 %v1133, %v1140
        %v1142 = vld [vmem:[#allocation14] sm:$0x1]
        %v1144 = vlaneseq
        %v1145 = vshrl.u32 %v1144, 7
        %v1146 = vsub.s32 0, %v1145
        %v1147 = vrot.slane %v1142, %v1146
        %v1149 = vmul.f32 %v1141, %v1147
        %v1150 = vld [vmem:[#allocation16] sm:$0x1]
        %v1152 = vlaneseq
        %v1153 = vshrl.u32 %v1152, 7
        %v1154 = vsub.s32 0, %v1153
        %v1155 = vrot.slane %v1150, %v1154
        %v1157 = vadd.f32 %v1149, %v1155
        %1158 = vst.msk [vmem:[%s600] sm:$0xff] %vm613, %v1157
        %s1159 = sand.u32 %s328, 1
        %s1160 = scalar_lea.sflag [#allocation4], %s1159
        %s1161 = sand.u32 %s328, 1
        %s1162 = smul.addr %s1161, 8
        %s1163 = scalar_lea.vmem [#allocation19], %s1162
        // Predicated region
        $region113: #{tpu_custom_call.1} parent=71 // pred_check
          %p1164 = pneg %p338
        $region114: #{tpu_custom_call.1} parent=71 // pred_check_branch
          %1166 = sbr.rel (%p1164) target = $region116
        $region115: #{tpu_custom_call.1} parent=71 // pred_region
          %s1168 = ssub.s32 128, 128
          %1169 = vsyncadd %s1160, %s1168
          %s1170 = smul.addr %s37, 128
          %s1171 = scalar_lea.hbm %s13, %s1170
          %s1173 = sshll.u32 %s1163, 4
          %s1174 = int_to_ptr.vmem [resolvable:$true] %s1173
          %1176 = dma.vmem_to_hbm [thread:$0]  %s1174, 128, %s1171, %s1160
        $region116: #{tpu_custom_call.1} parent=71 // pred_fallthru
          _
      $region72: #{tpu_custom_call.1} parent=5 // pred_fallthru
        _
      %p1177 = scmp.le.s32.totalorder 2, %s32
      // Predicated region
      $region117: #{tpu_custom_call.1} parent=5 // pred_check
        %p1178 = pneg %p1177
      $region118: #{tpu_custom_call.1} parent=5 // pred_check_branch
        %1180 = sbr.rel (%p1178) target = $region120
      $region119: #{tpu_custom_call.1} parent=5 // pred_region
        %s1181 = ssub.s32 %s32, 2
        // Predicated region
        $region121: #{tpu_custom_call.1} parent=119 // pred_check
          %p1182 = pneg %p344
        $region122: #{tpu_custom_call.1} parent=119 // pred_check_branch
          %1184 = sbr.rel (%p1182) target = $region124
        $region123: #{tpu_custom_call.1} parent=119 // pred_region
          %s1185 = sand.u32 %s329, 1
          %s1186 = scalar_lea.sflag [#allocation4], %s1185
          %s1187 = sand.u32 %s329, 1
          %s1188 = smul.addr %s1187, 8
          %s1189 = scalar_lea.vmem [#allocation19], %s1188
          %1190 = dma.done %s1186, 128
        $region124: #{tpu_custom_call.1} parent=119 // pred_fallthru
          _
      $region120: #{tpu_custom_call.1} parent=5 // pred_fallthru
        _
    $region6: #{tpu_custom_call.1} parent=1 // loop_footer
      %s36 = sadd.s32 1, %s32
    $region7: #{tpu_custom_call.1} parent=1 // loop_footer_branch
      %31 = sbr.rel target = $region3
    $region8: #{tpu_custom_call.1} parent=1 // loop_exit
      _
    %1191 = vsyncpa [#allocation3], 1
    %s1192 = scalar_lea.sflag [#allocation3], 1
    %1193 = vsyncpa %s1192, 1
    %1194 = vsyncpa [#allocation6], 1
    %s1195 = scalar_lea.sflag [#allocation6], 1
    %1196 = vsyncpa %s1195, 1
    %1197 = vsyncpa [#allocation9], 1
    %1198 = vsyncpa [#allocation12], 1
    %1199 = vsyncpa [#allocation15], 1
    %1200 = vsyncpa [#allocation18], 1
    %1201 = vsyncpa [#allocation4], 1
    %s1202 = scalar_lea.sflag [#allocation4], 1
    %1203 = vsyncpa %s1202, 1

</llo_original>
